<compile_context>
chip_gen: v6e
topology: v6e:2x2x1
jax: 0.10.0
libtpu: 0.0.40
codegen_flags: <defaults>
</compile_context>

<pallas_src>
import jax
import jax.numpy as jnp
from jax.experimental import pallas as pl
from jax.experimental.pallas import tpu as pltpu


# ----------------------------- fused forward kernel ---------------------------
def _make_fused_decoder_kernel(num_layers, Tp1, Bb, E, H, Vp):
    """Kernel ref order:
       x, (w_ih, w_hh, bias) * num_layers, linear_w, linear_b, out, xg_scr, hid_scr.

       x       : (Tp1*Bb, E)   bf16
       w_ih    : (in, 4H)      bf16      w_hh: (H, 4H) bf16     bias: (1, 4H) f32
       linear_w: (H, Vp)       bf16      linear_b: (1, Vp) f32
       out     : (Tp1*Bb, Vp)  f32
       xg_scr  : (Tp1*Bb, 4H)  f32       hid_scr: (Tp1*Bb, H) bf16
    """

    def kernel(*refs):
        x_ref = refs[0]
        lstm_refs = refs[1:1 + 3 * num_layers]
        lw_ref = refs[1 + 3 * num_layers]
        lb_ref = refs[2 + 3 * num_layers]
        out_ref = refs[3 + 3 * num_layers]
        xg_ref = refs[4 + 3 * num_layers]
        hid_ref = refs[5 + 3 * num_layers]

        # Loop-invariant gate-lane mask, computed ONCE (hoisted out of the
        # recurrence and the layer loop).
        lane = jax.lax.broadcasted_iota(jnp.int32, (Bb, 4 * H), 1)
        is_g = (lane >= 2 * H) & (lane < 3 * H)

        for l in range(num_layers):                # static unroll over layers
            w_ih = lstm_refs[3 * l][...]           # (in, 4H) bf16
            w_hh = lstm_refs[3 * l + 1][...]       # (H, 4H)  bf16
            bias = lstm_refs[3 * l + 2][...]       # (1, 4H)  f32

            # ---- hoisted input projection: one matmul covering all T+1 steps ----
            inp2d = x_ref[...] if l == 0 else hid_ref[...]      # bf16, no reshape
            xg_ref[...] = jnp.dot(inp2d, w_ih,
                                  preferred_element_type=jnp.float32) + bias

            # ---- serial recurrence: only h @ W_hh + gate math per time step ----
            def step(t, carry):
                h, c = carry                       # h: (Bb,H) bf16, c: (Bb,H) f32
                r = pl.multiple_of(t * Bb, Bb)     # sublane-aligned row offset
                gates = xg_ref[pl.ds(r, Bb), :] + jnp.dot(
                    h, w_hh, preferred_element_type=jnp.float32)
                # Single transcendental pass: tanh(x) = 2*sigmoid(2x) - 1.
                s = jax.nn.sigmoid(jnp.where(is_g, 2.0 * gates, gates))
                act = jnp.where(is_g, 2.0 * s - 1.0, s)
                i_g = act[:, 0 * H:1 * H]
                f_g = act[:, 1 * H:2 * H]
                g_g = act[:, 2 * H:3 * H]
                o_g = act[:, 3 * H:4 * H]
                c_new = f_g * c + i_g * g_g
                h_new = (o_g * jnp.tanh(c_new)).astype(jnp.bfloat16)
                hid_ref[pl.ds(r, Bb), :] = h_new
                return h_new, c_new

            init = (jnp.zeros((Bb, H), jnp.bfloat16),
                    jnp.zeros((Bb, H), jnp.float32))
            jax.lax.fori_loop(0, Tp1, step, init,
                              unroll=True if Tp1 <= 16 else 8)

        # ---- output projection on the whole sequence + single bulk writeback ----
        out_ref[...] = jnp.dot(hid_ref[...], lw_ref[...],
                               preferred_element_type=jnp.float32) + lb_ref[...]

    return kernel


def fused_decoder_forward(x, lstm_weights, linear_w, linear_b):
    """x: (T+1, B, E) f32; lstm_weights: [(w_ih, w_hh, bias), ...] (bf16/bf16/f32);
       linear_w: (H, V) bf16; linear_b: (1, V) f32  ->  (T+1, B, V) f32."""
    Tp1, B, E = x.shape
    H = lstm_weights[0][1].shape[0]
    V = linear_w.shape[1]
    num_layers = len(lstm_weights)

    # Parallel batch-block grid axis (v7x: 2 TensorCores). Only split if each
    # block keeps sublane-aligned (multiple of 8) rows.
    NB = 2 if (B % 16 == 0) else 1
    Bb = B // NB

    # Lane-dense pad of the vocab dimension to a multiple of 128.
    Vp = ((V + 127) // 128) * 128
    lw = jnp.pad(linear_w, ((0, 0), (0, Vp - V)))
    lb = jnp.pad(linear_b, ((0, 0), (0, Vp - V)))

    # Batch-block + time-major flatten: (Tp1, B, E) -> (NB, Tp1*Bb, E), bf16.
    xb = (x.reshape(Tp1, NB, Bb, E).transpose(1, 0, 2, 3)
            .reshape(NB, Tp1 * Bb, E).astype(jnp.bfloat16))

    flat = []
    for (w_ih, w_hh, bias) in lstm_weights:
        flat += [w_ih, w_hh, bias]
    flat += [lw, lb]

    in_specs = [pl.BlockSpec((None, Tp1 * Bb, E), lambda b: (b, 0, 0))]
    for a in flat:  # weights: full 2-D arrays, same block every grid point
        in_specs.append(pl.BlockSpec(a.shape, lambda b: (0, 0)))
    out_spec = pl.BlockSpec((None, Tp1 * Bb, Vp), lambda b: (b, 0, 0))

    kernel = _make_fused_decoder_kernel(num_layers, Tp1, Bb, E, H, Vp)
    out = pl.pallas_call(
        kernel,
        out_shape=jax.ShapeDtypeStruct((NB, Tp1 * Bb, Vp), jnp.float32),
        grid_spec=pltpu.PrefetchScalarGridSpec(
            num_scalar_prefetch=0,
            grid=(NB,),
            in_specs=in_specs,
            out_specs=out_spec,
            scratch_shapes=[pltpu.VMEM((Tp1 * Bb, 4 * H), jnp.float32),
                            pltpu.VMEM((Tp1 * Bb, H), jnp.bfloat16)],
        ),
        compiler_params=pltpu.CompilerParams(
            dimension_semantics=("parallel",)),
    )(xb, *flat)

    # (NB, Tp1*Bb, Vp) -> (Tp1, B, V)  (layout plumbing in the wrapper, not kernel)
    out = (out.reshape(NB, Tp1, Bb, Vp).transpose(1, 0, 2, 3)
              .reshape(Tp1, B, Vp)[:, :, :V])
    return out


# ----------------------------- DecoderRNN forward ------------------------------
@jax.jit
def decoder_rnn_forward(params, features, captions):
    """features: (B, E) f32; captions: (T, B) int32  ->  (T+1, B, V) f32."""
    # Embedding gather + feature concat: cheap glue in plain JAX.
    embeddings = params["embed_weight"][captions]                    # (T, B, E)
    # Dropout(0.5) in eval mode == identity.
    x = jnp.concatenate([features[None, :, :], embeddings], axis=0)  # (T+1, B, E)
    lstm_weights = [(lyr["w_ih"], lyr["w_hh"], lyr["bias"]) for lyr in params["lstm"]]
    return fused_decoder_forward(x, lstm_weights,
                                 params["linear_w"], params["linear_b"])


# ----------------------------- pure-JAX f32 reference --------------------------
def decoder_rnn_reference(params, features, captions):
    emb = params["embed_weight"][captions]
    x = jnp.concatenate([features[None, :, :], emb], axis=0)
    B = x.shape[1]
    h_seq = x
    for layer in params["lstm"]:
        w_ih = layer["w_ih"].astype(jnp.float32)
        w_hh = layer["w_hh"].astype(jnp.float32)
        b = layer["bias"]
        H = w_hh.shape[0]

        def step(carry, x_t):
            h, c = carry
            g = x_t @ w_ih + h @ w_hh + b
            i = jax.nn.sigmoid(g[:, 0 * H:1 * H])
            f = jax.nn.sigmoid(g[:, 1 * H:2 * H])
            gg = jnp.tanh(g[:, 2 * H:3 * H])
            o = jax.nn.sigmoid(g[:, 3 * H:4 * H])
            c = f * c + i * gg
            h = o * jnp.tanh(c)
            return (h, c), h

        init = (jnp.zeros((B, H), jnp.float32), jnp.zeros((B, H), jnp.float32))
        _, h_seq = jax.lax.scan(step, init, h_seq)
    return h_seq @ params["linear_w"].astype(jnp.float32) + params["linear_b"]


# ----------------------------- Parameter init -----------------------------------
def init_params(key, embed_size, hidden_size, vocab_size, num_layers):
    keys = jax.random.split(key, 4 + 4 * num_layers)
    k = iter(keys)
    scale = 1.0 / jnp.sqrt(hidden_size)

    params = {
        "embed_weight": jax.random.normal(next(k), (vocab_size, embed_size),
                                          jnp.float32),
        "lstm": [],
        # Linear stored transposed (H, V); matmul weights kept in bf16 for the MXU
        # (f32 accumulation inside the kernel), biases in f32.
        "linear_w": jax.random.uniform(next(k), (hidden_size, vocab_size),
                                       jnp.float32, -scale, scale).astype(jnp.bfloat16),
        "linear_b": jax.random.uniform(next(k), (1, vocab_size),
                                       jnp.float32, -scale, scale),
    }
    for l in range(num_layers):
        in_size = embed_size if l == 0 else hidden_size
        w_ih = jax.random.uniform(next(k), (in_size, 4 * hidden_size),
                                  jnp.float32, -scale, scale).astype(jnp.bfloat16)
        w_hh = jax.random.uniform(next(k), (hidden_size, 4 * hidden_size),
                                  jnp.float32, -scale, scale).astype(jnp.bfloat16)
        # PyTorch has b_ih + b_hh; fold into a single f32 bias row.
        b_ih = jax.random.uniform(next(k), (4 * hidden_size,),
                                  jnp.float32, -scale, scale)
        b_hh = jax.random.uniform(next(k), (4 * hidden_size,),
                                  jnp.float32, -scale, scale)
        params["lstm"].append({"w_ih": w_ih, "w_hh": w_hh,
                               "bias": (b_ih + b_hh)[None, :]})
    return params


# ----------------------------- Main ---------------------------------------------
if __name__ == "__main__":
    embed_size = 32
    hidden_size = 32
    vocab_size = 64
    num_layers = 2
    batch = 16          # 2 batch-blocks of 8 -> parallel grid axis (2 TCs on v7x)
    seq_len = 6

    root = jax.random.PRNGKey(0)
    k_params, k_feat, k_cap = jax.random.split(root, 3)

    params = init_params(k_params, embed_size, hidden_size, vocab_size, num_layers)
    features = jax.random.normal(k_feat, (batch, embed_size), jnp.float32)
    captions = jax.random.randint(k_cap, (seq_len, batch), 0, vocab_size,
                                  dtype=jnp.int32)

    out = decoder_rnn_forward(params, features, captions)
    out = jax.block_until_ready(out)

    assert out.shape == (seq_len + 1, batch, vocab_size), out.shape
    assert bool(jnp.all(jnp.isfinite(out)))

    # Correctness vs pure-JAX f32 reference (bf16 MXU inputs / bf16 hidden state
    # -> loose tolerance).
    ref = decoder_rnn_reference(params, features, captions)
    max_err = float(jnp.max(jnp.abs(out - ref)))
    assert bool(jnp.allclose(out, ref, atol=1e-1, rtol=1e-1)), max_err

    print("KERNEL_OK")
</pallas_src>

<mosaic_0001>
module attributes {stable_mosaic.version = 11 : i64} {
  func.func @kernel(%arg0: i32, %arg1: memref<1x56x32xbf16, #tpu.memory_space<vmem>>, %arg2: memref<32x128xbf16, #tpu.memory_space<vmem>>, %arg3: memref<32x128xbf16, #tpu.memory_space<vmem>>, %arg4: memref<1x128xf32, #tpu.memory_space<vmem>>, %arg5: memref<32x128xbf16, #tpu.memory_space<vmem>>, %arg6: memref<32x128xbf16, #tpu.memory_space<vmem>>, %arg7: memref<1x128xf32, #tpu.memory_space<vmem>>, %arg8: memref<32x128xbf16, #tpu.memory_space<vmem>>, %arg9: memref<1x128xf32, #tpu.memory_space<vmem>>, %arg10: memref<1x56x128xf32, #tpu.memory_space<vmem>>, %arg11: memref<56x128xf32, #tpu.memory_space<vmem>>, %arg12: memref<56x32xbf16, #tpu.memory_space<vmem>>) attributes {dimension_semantics = [#tpu.dimension_semantics<parallel>], iteration_bounds = array<i64: 2>, scalar_prefetch = 0 : i64, scratch_operands = 2 : i64, tpu.core_type = #tpu.core_type<tc>, window_params = [{transform_indices = @transform_0, window_bounds = array<i64: 1, 56, 32>}, {pipeline_mode = #tpu.pipeline_mode<synchronous>, transform_indices = @transform_1, window_bounds = array<i64: 32, 128>}, {pipeline_mode = #tpu.pipeline_mode<synchronous>, transform_indices = @transform_2, window_bounds = array<i64: 32, 128>}, {pipeline_mode = #tpu.pipeline_mode<synchronous>, transform_indices = @transform_3, window_bounds = array<i64: 1, 128>}, {pipeline_mode = #tpu.pipeline_mode<synchronous>, transform_indices = @transform_4, window_bounds = array<i64: 32, 128>}, {pipeline_mode = #tpu.pipeline_mode<synchronous>, transform_indices = @transform_5, window_bounds = array<i64: 32, 128>}, {pipeline_mode = #tpu.pipeline_mode<synchronous>, transform_indices = @transform_6, window_bounds = array<i64: 1, 128>}, {pipeline_mode = #tpu.pipeline_mode<synchronous>, transform_indices = @transform_7, window_bounds = array<i64: 32, 128>}, {pipeline_mode = #tpu.pipeline_mode<synchronous>, transform_indices = @transform_8, window_bounds = array<i64: 1, 128>}, {transform_indices = @transform_9, window_bounds = array<i64: 1, 56, 128>}]} {
    %0 = tpu.iota {dimensions = array<i32: 1>} : vector<8x128xi32>
    %c64_i32 = arith.constant 64 : i32
    %1 = vector.broadcast %c64_i32 : i32 to vector<8x128xi32>
    %2 = arith.cmpi sge, %0, %1 : vector<8x128xi32>
    %c96_i32 = arith.constant 96 : i32
    %3 = vector.broadcast %c96_i32 : i32 to vector<8x128xi32>
    %4 = arith.cmpi slt, %0, %3 : vector<8x128xi32>
    %5 = arith.andi %2, %4 : vector<8x128xi1>
    %c0 = arith.constant 0 : index
    %c0_0 = arith.constant 0 : index
    %6 = vector.load %arg2[%c0, %c0_0] : memref<32x128xbf16, #tpu.memory_space<vmem>>, vector<32x128xbf16>
    %c0_1 = arith.constant 0 : index
    %c0_2 = arith.constant 0 : index
    %7 = vector.load %arg3[%c0_1, %c0_2] : memref<32x128xbf16, #tpu.memory_space<vmem>>, vector<32x128xbf16>
    %c0_3 = arith.constant 0 : index
    %c0_4 = arith.constant 0 : index
    %8 = vector.load %arg4[%c0_3, %c0_4] : memref<1x128xf32, #tpu.memory_space<vmem>>, vector<1x128xf32>
    %c0_5 = arith.constant 0 : index
    %c0_6 = arith.constant 0 : index
    %c0_7 = arith.constant 0 : index
    %9 = vector.load %arg1[%c0_5, %c0_6, %c0_7] : memref<1x56x32xbf16, #tpu.memory_space<vmem>>, vector<1x56x32xbf16>
    %10 = vector.shape_cast %9 : vector<1x56x32xbf16> to vector<56x32xbf16>
    %cst = arith.constant dense<0.000000e+00> : vector<56x128xf32>
    %11 = tpu.matmul %10, %6, %cst {dimension_numbers = #tpu.dot_dimension_numbers<[1], [0], [0], [1], [0, 0, 1, 1], [], []>} : vector<56x32xbf16>, vector<32x128xbf16>, vector<56x128xf32> -> vector<56x128xf32>
    %12 = vector.broadcast %8 : vector<1x128xf32> to vector<56x128xf32>
    %13 = arith.addf %11, %12 : vector<56x128xf32>
    %c0_8 = arith.constant 0 : index
    %c0_9 = arith.constant 0 : index
    %14 = vector.load %arg11[%c0_8, %c0_9] : memref<56x128xf32, #tpu.memory_space<vmem>>, vector<56x128xf32>
    tpu.vector_store %arg11[%c0_8, %c0_9], %13 {strides = array<i32>} : memref<56x128xf32, #tpu.memory_space<vmem>>, vector<56x128xf32>,
    %cst_10 = arith.constant 0.000000e+00 : bf16
    %15 = vector.broadcast %cst_10 : bf16 to vector<8x32xbf16>
    %cst_11 = arith.constant 0.000000e+00 : f32
    %16 = vector.broadcast %cst_11 : f32 to vector<8x32xf32>
    %c0_i32 = arith.constant 0 : i32
    %c8_i32 = arith.constant 8 : i32
    %17 = arith.muli %c0_i32, %c8_i32 : i32
    %18 = tpu.assume_multiple %17, 8 : i32
    %19 = arith.index_cast %18 : i32 to index
    %c0_12 = arith.constant 0 : index
    %20 = vector.load %arg11[%19, %c0_12] : memref<56x128xf32, #tpu.memory_space<vmem>>, vector<8x128xf32>
    %cst_13 = arith.constant dense<0.000000e+00> : vector<8x128xf32>
    %21 = tpu.matmul %15, %7, %cst_13 {dimension_numbers = #tpu.dot_dimension_numbers<[1], [0], [0], [1], [0, 0, 1, 1], [], []>} : vector<8x32xbf16>, vector<32x128xbf16>, vector<8x128xf32> -> vector<8x128xf32>
    %22 = arith.addf %20, %21 : vector<8x128xf32>
    %cst_14 = arith.constant 2.000000e+00 : f32
    %23 = vector.broadcast %cst_14 : f32 to vector<8x128xf32>
    %24 = arith.mulf %23, %22 : vector<8x128xf32>
    %25 = arith.select %5, %24, %22 : vector<8x128xi1>, vector<8x128xf32>
    %26 = arith.negf %25 : vector<8x128xf32>
    %27 = math.exp %26 : vector<8x128xf32>
    %cst_15 = arith.constant 1.000000e+00 : f32
    %28 = vector.broadcast %cst_15 : f32 to vector<8x128xf32>
    %29 = arith.addf %28, %27 : vector<8x128xf32>
    %30 = arith.divf %28, %29 : vector<8x128xf32>
    %cst_16 = arith.constant 2.000000e+00 : f32
    %31 = vector.broadcast %cst_16 : f32 to vector<8x128xf32>
    %32 = arith.mulf %31, %30 : vector<8x128xf32>
    %cst_17 = arith.constant 1.000000e+00 : f32
    %33 = vector.broadcast %cst_17 : f32 to vector<8x128xf32>
    %34 = arith.subf %32, %33 : vector<8x128xf32>
    %35 = arith.select %5, %34, %30 : vector<8x128xi1>, vector<8x128xf32>
    %36 = vector.extract_strided_slice %35 {offsets = [0, 0], sizes = [8, 32], strides = [1, 1]} : vector<8x128xf32> to vector<8x32xf32>
    %37 = vector.extract_strided_slice %35 {offsets = [0, 32], sizes = [8, 32], strides = [1, 1]} : vector<8x128xf32> to vector<8x32xf32>
    %38 = vector.extract_strided_slice %35 {offsets = [0, 64], sizes = [8, 32], strides = [1, 1]} : vector<8x128xf32> to vector<8x32xf32>
    %39 = vector.extract_strided_slice %35 {offsets = [0, 96], sizes = [8, 32], strides = [1, 1]} : vector<8x128xf32> to vector<8x32xf32>
    %40 = arith.mulf %37, %16 : vector<8x32xf32>
    %41 = arith.mulf %36, %38 : vector<8x32xf32>
    %42 = arith.addf %40, %41 : vector<8x32xf32>
    %43 = math.tanh %42 : vector<8x32xf32>
    %44 = arith.mulf %39, %43 : vector<8x32xf32>
    %45 = arith.truncf %44 : vector<8x32xf32> to vector<8x32xbf16>
    %46 = arith.index_cast %18 : i32 to index
    %c0_18 = arith.constant 0 : index
    %47 = vector.load %arg12[%46, %c0_18] : memref<56x32xbf16, #tpu.memory_space<vmem>>, vector<8x32xbf16>
    tpu.vector_store %arg12[%46, %c0_18], %45 {strides = array<i32>} : memref<56x32xbf16, #tpu.memory_space<vmem>>, vector<8x32xbf16>,
    %c1_i32 = arith.constant 1 : i32
    %c8_i32_19 = arith.constant 8 : i32
    %48 = arith.muli %c1_i32, %c8_i32_19 : i32
    %49 = tpu.assume_multiple %48, 8 : i32
    %50 = arith.index_cast %49 : i32 to index
    %c0_20 = arith.constant 0 : index
    %51 = vector.load %arg11[%50, %c0_20] : memref<56x128xf32, #tpu.memory_space<vmem>>, vector<8x128xf32>
    %cst_21 = arith.constant dense<0.000000e+00> : vector<8x128xf32>
    %52 = tpu.matmul %45, %7, %cst_21 {dimension_numbers = #tpu.dot_dimension_numbers<[1], [0], [0], [1], [0, 0, 1, 1], [], []>} : vector<8x32xbf16>, vector<32x128xbf16>, vector<8x128xf32> -> vector<8x128xf32>
    %53 = arith.addf %51, %52 : vector<8x128xf32>
    %cst_22 = arith.constant 2.000000e+00 : f32
    %54 = vector.broadcast %cst_22 : f32 to vector<8x128xf32>
    %55 = arith.mulf %54, %53 : vector<8x128xf32>
    %56 = arith.select %5, %55, %53 : vector<8x128xi1>, vector<8x128xf32>
    %57 = arith.negf %56 : vector<8x128xf32>
    %58 = math.exp %57 : vector<8x128xf32>
    %cst_23 = arith.constant 1.000000e+00 : f32
    %59 = vector.broadcast %cst_23 : f32 to vector<8x128xf32>
    %60 = arith.addf %59, %58 : vector<8x128xf32>
    %61 = arith.divf %59, %60 : vector<8x128xf32>
    %cst_24 = arith.constant 2.000000e+00 : f32
    %62 = vector.broadcast %cst_24 : f32 to vector<8x128xf32>
    %63 = arith.mulf %62, %61 : vector<8x128xf32>
    %cst_25 = arith.constant 1.000000e+00 : f32
    %64 = vector.broadcast %cst_25 : f32 to vector<8x128xf32>
    %65 = arith.subf %63, %64 : vector<8x128xf32>
    %66 = arith.select %5, %65, %61 : vector<8x128xi1>, vector<8x128xf32>
    %67 = vector.extract_strided_slice %66 {offsets = [0, 0], sizes = [8, 32], strides = [1, 1]} : vector<8x128xf32> to vector<8x32xf32>
    %68 = vector.extract_strided_slice %66 {offsets = [0, 32], sizes = [8, 32], strides = [1, 1]} : vector<8x128xf32> to vector<8x32xf32>
    %69 = vector.extract_strided_slice %66 {offsets = [0, 64], sizes = [8, 32], strides = [1, 1]} : vector<8x128xf32> to vector<8x32xf32>
    %70 = vector.extract_strided_slice %66 {offsets = [0, 96], sizes = [8, 32], strides = [1, 1]} : vector<8x128xf32> to vector<8x32xf32>
    %71 = arith.mulf %68, %42 : vector<8x32xf32>
    %72 = arith.mulf %67, %69 : vector<8x32xf32>
    %73 = arith.addf %71, %72 : vector<8x32xf32>
    %74 = math.tanh %73 : vector<8x32xf32>
    %75 = arith.mulf %70, %74 : vector<8x32xf32>
    %76 = arith.truncf %75 : vector<8x32xf32> to vector<8x32xbf16>
    %77 = arith.index_cast %49 : i32 to index
    %c0_26 = arith.constant 0 : index
    %78 = vector.load %arg12[%77, %c0_26] : memref<56x32xbf16, #tpu.memory_space<vmem>>, vector<8x32xbf16>
    tpu.vector_store %arg12[%77, %c0_26], %76 {strides = array<i32>} : memref<56x32xbf16, #tpu.memory_space<vmem>>, vector<8x32xbf16>,
    %c2_i32 = arith.constant 2 : i32
    %c8_i32_27 = arith.constant 8 : i32
    %79 = arith.muli %c2_i32, %c8_i32_27 : i32
    %80 = tpu.assume_multiple %79, 8 : i32
    %81 = arith.index_cast %80 : i32 to index
    %c0_28 = arith.constant 0 : index
    %82 = vector.load %arg11[%81, %c0_28] : memref<56x128xf32, #tpu.memory_space<vmem>>, vector<8x128xf32>
    %cst_29 = arith.constant dense<0.000000e+00> : vector<8x128xf32>
    %83 = tpu.matmul %76, %7, %cst_29 {dimension_numbers = #tpu.dot_dimension_numbers<[1], [0], [0], [1], [0, 0, 1, 1], [], []>} : vector<8x32xbf16>, vector<32x128xbf16>, vector<8x128xf32> -> vector<8x128xf32>
    %84 = arith.addf %82, %83 : vector<8x128xf32>
    %cst_30 = arith.constant 2.000000e+00 : f32
    %85 = vector.broadcast %cst_30 : f32 to vector<8x128xf32>
    %86 = arith.mulf %85, %84 : vector<8x128xf32>
    %87 = arith.select %5, %86, %84 : vector<8x128xi1>, vector<8x128xf32>
    %88 = arith.negf %87 : vector<8x128xf32>
    %89 = math.exp %88 : vector<8x128xf32>
    %cst_31 = arith.constant 1.000000e+00 : f32
    %90 = vector.broadcast %cst_31 : f32 to vector<8x128xf32>
    %91 = arith.addf %90, %89 : vector<8x128xf32>
    %92 = arith.divf %90, %91 : vector<8x128xf32>
    %cst_32 = arith.constant 2.000000e+00 : f32
    %93 = vector.broadcast %cst_32 : f32 to vector<8x128xf32>
    %94 = arith.mulf %93, %92 : vector<8x128xf32>
    %cst_33 = arith.constant 1.000000e+00 : f32
    %95 = vector.broadcast %cst_33 : f32 to vector<8x128xf32>
    %96 = arith.subf %94, %95 : vector<8x128xf32>
    %97 = arith.select %5, %96, %92 : vector<8x128xi1>, vector<8x128xf32>
    %98 = vector.extract_strided_slice %97 {offsets = [0, 0], sizes = [8, 32], strides = [1, 1]} : vector<8x128xf32> to vector<8x32xf32>
    %99 = vector.extract_strided_slice %97 {offsets = [0, 32], sizes = [8, 32], strides = [1, 1]} : vector<8x128xf32> to vector<8x32xf32>
    %100 = vector.extract_strided_slice %97 {offsets = [0, 64], sizes = [8, 32], strides = [1, 1]} : vector<8x128xf32> to vector<8x32xf32>
    %101 = vector.extract_strided_slice %97 {offsets = [0, 96], sizes = [8, 32], strides = [1, 1]} : vector<8x128xf32> to vector<8x32xf32>
    %102 = arith.mulf %99, %73 : vector<8x32xf32>
    %103 = arith.mulf %98, %100 : vector<8x32xf32>
    %104 = arith.addf %102, %103 : vector<8x32xf32>
    %105 = math.tanh %104 : vector<8x32xf32>
    %106 = arith.mulf %101, %105 : vector<8x32xf32>
    %107 = arith.truncf %106 : vector<8x32xf32> to vector<8x32xbf16>
    %108 = arith.index_cast %80 : i32 to index
    %c0_34 = arith.constant 0 : index
    %109 = vector.load %arg12[%108, %c0_34] : memref<56x32xbf16, #tpu.memory_space<vmem>>, vector<8x32xbf16>
    tpu.vector_store %arg12[%108, %c0_34], %107 {strides = array<i32>} : memref<56x32xbf16, #tpu.memory_space<vmem>>, vector<8x32xbf16>,
    %c3_i32 = arith.constant 3 : i32
    %c8_i32_35 = arith.constant 8 : i32
    %110 = arith.muli %c3_i32, %c8_i32_35 : i32
    %111 = tpu.assume_multiple %110, 8 : i32
    %112 = arith.index_cast %111 : i32 to index
    %c0_36 = arith.constant 0 : index
    %113 = vector.load %arg11[%112, %c0_36] : memref<56x128xf32, #tpu.memory_space<vmem>>, vector<8x128xf32>
    %cst_37 = arith.constant dense<0.000000e+00> : vector<8x128xf32>
    %114 = tpu.matmul %107, %7, %cst_37 {dimension_numbers = #tpu.dot_dimension_numbers<[1], [0], [0], [1], [0, 0, 1, 1], [], []>} : vector<8x32xbf16>, vector<32x128xbf16>, vector<8x128xf32> -> vector<8x128xf32>
    %115 = arith.addf %113, %114 : vector<8x128xf32>
    %cst_38 = arith.constant 2.000000e+00 : f32
    %116 = vector.broadcast %cst_38 : f32 to vector<8x128xf32>
    %117 = arith.mulf %116, %115 : vector<8x128xf32>
    %118 = arith.select %5, %117, %115 : vector<8x128xi1>, vector<8x128xf32>
    %119 = arith.negf %118 : vector<8x128xf32>
    %120 = math.exp %119 : vector<8x128xf32>
    %cst_39 = arith.constant 1.000000e+00 : f32
    %121 = vector.broadcast %cst_39 : f32 to vector<8x128xf32>
    %122 = arith.addf %121, %120 : vector<8x128xf32>
    %123 = arith.divf %121, %122 : vector<8x128xf32>
    %cst_40 = arith.constant 2.000000e+00 : f32
    %124 = vector.broadcast %cst_40 : f32 to vector<8x128xf32>
    %125 = arith.mulf %124, %123 : vector<8x128xf32>
    %cst_41 = arith.constant 1.000000e+00 : f32
    %126 = vector.broadcast %cst_41 : f32 to vector<8x128xf32>
    %127 = arith.subf %125, %126 : vector<8x128xf32>
    %128 = arith.select %5, %127, %123 : vector<8x128xi1>, vector<8x128xf32>
    %129 = vector.extract_strided_slice %128 {offsets = [0, 0], sizes = [8, 32], strides = [1, 1]} : vector<8x128xf32> to vector<8x32xf32>
    %130 = vector.extract_strided_slice %128 {offsets = [0, 32], sizes = [8, 32], strides = [1, 1]} : vector<8x128xf32> to vector<8x32xf32>
    %131 = vector.extract_strided_slice %128 {offsets = [0, 64], sizes = [8, 32], strides = [1, 1]} : vector<8x128xf32> to vector<8x32xf32>
    %132 = vector.extract_strided_slice %128 {offsets = [0, 96], sizes = [8, 32], strides = [1, 1]} : vector<8x128xf32> to vector<8x32xf32>
    %133 = arith.mulf %130, %104 : vector<8x32xf32>
    %134 = arith.mulf %129, %131 : vector<8x32xf32>
    %135 = arith.addf %133, %134 : vector<8x32xf32>
    %136 = math.tanh %135 : vector<8x32xf32>
    %137 = arith.mulf %132, %136 : vector<8x32xf32>
    %138 = arith.truncf %137 : vector<8x32xf32> to vector<8x32xbf16>
    %139 = arith.index_cast %111 : i32 to index
    %c0_42 = arith.constant 0 : index
    %140 = vector.load %arg12[%139, %c0_42] : memref<56x32xbf16, #tpu.memory_space<vmem>>, vector<8x32xbf16>
    tpu.vector_store %arg12[%139, %c0_42], %138 {strides = array<i32>} : memref<56x32xbf16, #tpu.memory_space<vmem>>, vector<8x32xbf16>,
    %c4_i32 = arith.constant 4 : i32
    %c8_i32_43 = arith.constant 8 : i32
    %141 = arith.muli %c4_i32, %c8_i32_43 : i32
    %142 = tpu.assume_multiple %141, 8 : i32
    %143 = arith.index_cast %142 : i32 to index
    %c0_44 = arith.constant 0 : index
    %144 = vector.load %arg11[%143, %c0_44] : memref<56x128xf32, #tpu.memory_space<vmem>>, vector<8x128xf32>
    %cst_45 = arith.constant dense<0.000000e+00> : vector<8x128xf32>
    %145 = tpu.matmul %138, %7, %cst_45 {dimension_numbers = #tpu.dot_dimension_numbers<[1], [0], [0], [1], [0, 0, 1, 1], [], []>} : vector<8x32xbf16>, vector<32x128xbf16>, vector<8x128xf32> -> vector<8x128xf32>
    %146 = arith.addf %144, %145 : vector<8x128xf32>
    %cst_46 = arith.constant 2.000000e+00 : f32
    %147 = vector.broadcast %cst_46 : f32 to vector<8x128xf32>
    %148 = arith.mulf %147, %146 : vector<8x128xf32>
    %149 = arith.select %5, %148, %146 : vector<8x128xi1>, vector<8x128xf32>
    %150 = arith.negf %149 : vector<8x128xf32>
    %151 = math.exp %150 : vector<8x128xf32>
    %cst_47 = arith.constant 1.000000e+00 : f32
    %152 = vector.broadcast %cst_47 : f32 to vector<8x128xf32>
    %153 = arith.addf %152, %151 : vector<8x128xf32>
    %154 = arith.divf %152, %153 : vector<8x128xf32>
    %cst_48 = arith.constant 2.000000e+00 : f32
    %155 = vector.broadcast %cst_48 : f32 to vector<8x128xf32>
    %156 = arith.mulf %155, %154 : vector<8x128xf32>
    %cst_49 = arith.constant 1.000000e+00 : f32
    %157 = vector.broadcast %cst_49 : f32 to vector<8x128xf32>
    %158 = arith.subf %156, %157 : vector<8x128xf32>
    %159 = arith.select %5, %158, %154 : vector<8x128xi1>, vector<8x128xf32>
    %160 = vector.extract_strided_slice %159 {offsets = [0, 0], sizes = [8, 32], strides = [1, 1]} : vector<8x128xf32> to vector<8x32xf32>
    %161 = vector.extract_strided_slice %159 {offsets = [0, 32], sizes = [8, 32], strides = [1, 1]} : vector<8x128xf32> to vector<8x32xf32>
    %162 = vector.extract_strided_slice %159 {offsets = [0, 64], sizes = [8, 32], strides = [1, 1]} : vector<8x128xf32> to vector<8x32xf32>
    %163 = vector.extract_strided_slice %159 {offsets = [0, 96], sizes = [8, 32], strides = [1, 1]} : vector<8x128xf32> to vector<8x32xf32>
    %164 = arith.mulf %161, %135 : vector<8x32xf32>
    %165 = arith.mulf %160, %162 : vector<8x32xf32>
    %166 = arith.addf %164, %165 : vector<8x32xf32>
    %167 = math.tanh %166 : vector<8x32xf32>
    %168 = arith.mulf %163, %167 : vector<8x32xf32>
    %169 = arith.truncf %168 : vector<8x32xf32> to vector<8x32xbf16>
    %170 = arith.index_cast %142 : i32 to index
    %c0_50 = arith.constant 0 : index
    %171 = vector.load %arg12[%170, %c0_50] : memref<56x32xbf16, #tpu.memory_space<vmem>>, vector<8x32xbf16>
    tpu.vector_store %arg12[%170, %c0_50], %169 {strides = array<i32>} : memref<56x32xbf16, #tpu.memory_space<vmem>>, vector<8x32xbf16>,
    %c5_i32 = arith.constant 5 : i32
    %c8_i32_51 = arith.constant 8 : i32
    %172 = arith.muli %c5_i32, %c8_i32_51 : i32
    %173 = tpu.assume_multiple %172, 8 : i32
    %174 = arith.index_cast %173 : i32 to index
    %c0_52 = arith.constant 0 : index
    %175 = vector.load %arg11[%174, %c0_52] : memref<56x128xf32, #tpu.memory_space<vmem>>, vector<8x128xf32>
    %cst_53 = arith.constant dense<0.000000e+00> : vector<8x128xf32>
    %176 = tpu.matmul %169, %7, %cst_53 {dimension_numbers = #tpu.dot_dimension_numbers<[1], [0], [0], [1], [0, 0, 1, 1], [], []>} : vector<8x32xbf16>, vector<32x128xbf16>, vector<8x128xf32> -> vector<8x128xf32>
    %177 = arith.addf %175, %176 : vector<8x128xf32>
    %cst_54 = arith.constant 2.000000e+00 : f32
    %178 = vector.broadcast %cst_54 : f32 to vector<8x128xf32>
    %179 = arith.mulf %178, %177 : vector<8x128xf32>
    %180 = arith.select %5, %179, %177 : vector<8x128xi1>, vector<8x128xf32>
    %181 = arith.negf %180 : vector<8x128xf32>
    %182 = math.exp %181 : vector<8x128xf32>
    %cst_55 = arith.constant 1.000000e+00 : f32
    %183 = vector.broadcast %cst_55 : f32 to vector<8x128xf32>
    %184 = arith.addf %183, %182 : vector<8x128xf32>
    %185 = arith.divf %183, %184 : vector<8x128xf32>
    %cst_56 = arith.constant 2.000000e+00 : f32
    %186 = vector.broadcast %cst_56 : f32 to vector<8x128xf32>
    %187 = arith.mulf %186, %185 : vector<8x128xf32>
    %cst_57 = arith.constant 1.000000e+00 : f32
    %188 = vector.broadcast %cst_57 : f32 to vector<8x128xf32>
    %189 = arith.subf %187, %188 : vector<8x128xf32>
    %190 = arith.select %5, %189, %185 : vector<8x128xi1>, vector<8x128xf32>
    %191 = vector.extract_strided_slice %190 {offsets = [0, 0], sizes = [8, 32], strides = [1, 1]} : vector<8x128xf32> to vector<8x32xf32>
    %192 = vector.extract_strided_slice %190 {offsets = [0, 32], sizes = [8, 32], strides = [1, 1]} : vector<8x128xf32> to vector<8x32xf32>
    %193 = vector.extract_strided_slice %190 {offsets = [0, 64], sizes = [8, 32], strides = [1, 1]} : vector<8x128xf32> to vector<8x32xf32>
    %194 = vector.extract_strided_slice %190 {offsets = [0, 96], sizes = [8, 32], strides = [1, 1]} : vector<8x128xf32> to vector<8x32xf32>
    %195 = arith.mulf %192, %166 : vector<8x32xf32>
    %196 = arith.mulf %191, %193 : vector<8x32xf32>
    %197 = arith.addf %195, %196 : vector<8x32xf32>
    %198 = math.tanh %197 : vector<8x32xf32>
    %199 = arith.mulf %194, %198 : vector<8x32xf32>
    %200 = arith.truncf %199 : vector<8x32xf32> to vector<8x32xbf16>
    %201 = arith.index_cast %173 : i32 to index
    %c0_58 = arith.constant 0 : index
    %202 = vector.load %arg12[%201, %c0_58] : memref<56x32xbf16, #tpu.memory_space<vmem>>, vector<8x32xbf16>
    tpu.vector_store %arg12[%201, %c0_58], %200 {strides = array<i32>} : memref<56x32xbf16, #tpu.memory_space<vmem>>, vector<8x32xbf16>,
    %c6_i32 = arith.constant 6 : i32
    %c8_i32_59 = arith.constant 8 : i32
    %203 = arith.muli %c6_i32, %c8_i32_59 : i32
    %204 = tpu.assume_multiple %203, 8 : i32
    %205 = arith.index_cast %204 : i32 to index
    %c0_60 = arith.constant 0 : index
    %206 = vector.load %arg11[%205, %c0_60] : memref<56x128xf32, #tpu.memory_space<vmem>>, vector<8x128xf32>
    %cst_61 = arith.constant dense<0.000000e+00> : vector<8x128xf32>
    %207 = tpu.matmul %200, %7, %cst_61 {dimension_numbers = #tpu.dot_dimension_numbers<[1], [0], [0], [1], [0, 0, 1, 1], [], []>} : vector<8x32xbf16>, vector<32x128xbf16>, vector<8x128xf32> -> vector<8x128xf32>
    %208 = arith.addf %206, %207 : vector<8x128xf32>
    %cst_62 = arith.constant 2.000000e+00 : f32
    %209 = vector.broadcast %cst_62 : f32 to vector<8x128xf32>
    %210 = arith.mulf %209, %208 : vector<8x128xf32>
    %211 = arith.select %5, %210, %208 : vector<8x128xi1>, vector<8x128xf32>
    %212 = arith.negf %211 : vector<8x128xf32>
    %213 = math.exp %212 : vector<8x128xf32>
    %cst_63 = arith.constant 1.000000e+00 : f32
    %214 = vector.broadcast %cst_63 : f32 to vector<8x128xf32>
    %215 = arith.addf %214, %213 : vector<8x128xf32>
    %216 = arith.divf %214, %215 : vector<8x128xf32>
    %cst_64 = arith.constant 2.000000e+00 : f32
    %217 = vector.broadcast %cst_64 : f32 to vector<8x128xf32>
    %218 = arith.mulf %217, %216 : vector<8x128xf32>
    %cst_65 = arith.constant 1.000000e+00 : f32
    %219 = vector.broadcast %cst_65 : f32 to vector<8x128xf32>
    %220 = arith.subf %218, %219 : vector<8x128xf32>
    %221 = arith.select %5, %220, %216 : vector<8x128xi1>, vector<8x128xf32>
    %222 = vector.extract_strided_slice %221 {offsets = [0, 0], sizes = [8, 32], strides = [1, 1]} : vector<8x128xf32> to vector<8x32xf32>
    %223 = vector.extract_strided_slice %221 {offsets = [0, 32], sizes = [8, 32], strides = [1, 1]} : vector<8x128xf32> to vector<8x32xf32>
    %224 = vector.extract_strided_slice %221 {offsets = [0, 64], sizes = [8, 32], strides = [1, 1]} : vector<8x128xf32> to vector<8x32xf32>
    %225 = vector.extract_strided_slice %221 {offsets = [0, 96], sizes = [8, 32], strides = [1, 1]} : vector<8x128xf32> to vector<8x32xf32>
    %226 = arith.mulf %223, %197 : vector<8x32xf32>
    %227 = arith.mulf %222, %224 : vector<8x32xf32>
    %228 = arith.addf %226, %227 : vector<8x32xf32>
    %229 = math.tanh %228 : vector<8x32xf32>
    %230 = arith.mulf %225, %229 : vector<8x32xf32>
    %231 = arith.truncf %230 : vector<8x32xf32> to vector<8x32xbf16>
    %232 = arith.index_cast %204 : i32 to index
    %c0_66 = arith.constant 0 : index
    %233 = vector.load %arg12[%232, %c0_66] : memref<56x32xbf16, #tpu.memory_space<vmem>>, vector<8x32xbf16>
    tpu.vector_store %arg12[%232, %c0_66], %231 {strides = array<i32>} : memref<56x32xbf16, #tpu.memory_space<vmem>>, vector<8x32xbf16>,
    %c7_i32 = arith.constant 7 : i32
    %c0_67 = arith.constant 0 : index
    %c0_68 = arith.constant 0 : index
    %234 = vector.load %arg5[%c0_67, %c0_68] : memref<32x128xbf16, #tpu.memory_space<vmem>>, vector<32x128xbf16>
    %c0_69 = arith.constant 0 : index
    %c0_70 = arith.constant 0 : index
    %235 = vector.load %arg6[%c0_69, %c0_70] : memref<32x128xbf16, #tpu.memory_space<vmem>>, vector<32x128xbf16>
    %c0_71 = arith.constant 0 : index
    %c0_72 = arith.constant 0 : index
    %236 = vector.load %arg7[%c0_71, %c0_72] : memref<1x128xf32, #tpu.memory_space<vmem>>, vector<1x128xf32>
    %c0_73 = arith.constant 0 : index
    %c0_74 = arith.constant 0 : index
    %237 = vector.load %arg12[%c0_73, %c0_74] : memref<56x32xbf16, #tpu.memory_space<vmem>>, vector<56x32xbf16>
    %cst_75 = arith.constant dense<0.000000e+00> : vector<56x128xf32>
    %238 = tpu.matmul %237, %234, %cst_75 {dimension_numbers = #tpu.dot_dimension_numbers<[1], [0], [0], [1], [0, 0, 1, 1], [], []>} : vector<56x32xbf16>, vector<32x128xbf16>, vector<56x128xf32> -> vector<56x128xf32>
    %239 = vector.broadcast %236 : vector<1x128xf32> to vector<56x128xf32>
    %240 = arith.addf %238, %239 : vector<56x128xf32>
    %c0_76 = arith.constant 0 : index
    %c0_77 = arith.constant 0 : index
    %241 = vector.load %arg11[%c0_76, %c0_77] : memref<56x128xf32, #tpu.memory_space<vmem>>, vector<56x128xf32>
    tpu.vector_store %arg11[%c0_76, %c0_77], %240 {strides = array<i32>} : memref<56x128xf32, #tpu.memory_space<vmem>>, vector<56x128xf32>,
    %cst_78 = arith.constant 0.000000e+00 : bf16
    %242 = vector.broadcast %cst_78 : bf16 to vector<8x32xbf16>
    %cst_79 = arith.constant 0.000000e+00 : f32
    %243 = vector.broadcast %cst_79 : f32 to vector<8x32xf32>
    %c0_i32_80 = arith.constant 0 : i32
    %c8_i32_81 = arith.constant 8 : i32
    %244 = arith.muli %c0_i32_80, %c8_i32_81 : i32
    %245 = tpu.assume_multiple %244, 8 : i32
    %246 = arith.index_cast %245 : i32 to index
    %c0_82 = arith.constant 0 : index
    %247 = vector.load %arg11[%246, %c0_82] : memref<56x128xf32, #tpu.memory_space<vmem>>, vector<8x128xf32>
    %cst_83 = arith.constant dense<0.000000e+00> : vector<8x128xf32>
    %248 = tpu.matmul %242, %235, %cst_83 {dimension_numbers = #tpu.dot_dimension_numbers<[1], [0], [0], [1], [0, 0, 1, 1], [], []>} : vector<8x32xbf16>, vector<32x128xbf16>, vector<8x128xf32> -> vector<8x128xf32>
    %249 = arith.addf %247, %248 : vector<8x128xf32>
    %cst_84 = arith.constant 2.000000e+00 : f32
    %250 = vector.broadcast %cst_84 : f32 to vector<8x128xf32>
    %251 = arith.mulf %250, %249 : vector<8x128xf32>
    %252 = arith.select %5, %251, %249 : vector<8x128xi1>, vector<8x128xf32>
    %253 = arith.negf %252 : vector<8x128xf32>
    %254 = math.exp %253 : vector<8x128xf32>
    %cst_85 = arith.constant 1.000000e+00 : f32
    %255 = vector.broadcast %cst_85 : f32 to vector<8x128xf32>
    %256 = arith.addf %255, %254 : vector<8x128xf32>
    %257 = arith.divf %255, %256 : vector<8x128xf32>
    %cst_86 = arith.constant 2.000000e+00 : f32
    %258 = vector.broadcast %cst_86 : f32 to vector<8x128xf32>
    %259 = arith.mulf %258, %257 : vector<8x128xf32>
    %cst_87 = arith.constant 1.000000e+00 : f32
    %260 = vector.broadcast %cst_87 : f32 to vector<8x128xf32>
    %261 = arith.subf %259, %260 : vector<8x128xf32>
    %262 = arith.select %5, %261, %257 : vector<8x128xi1>, vector<8x128xf32>
    %263 = vector.extract_strided_slice %262 {offsets = [0, 0], sizes = [8, 32], strides = [1, 1]} : vector<8x128xf32> to vector<8x32xf32>
    %264 = vector.extract_strided_slice %262 {offsets = [0, 32], sizes = [8, 32], strides = [1, 1]} : vector<8x128xf32> to vector<8x32xf32>
    %265 = vector.extract_strided_slice %262 {offsets = [0, 64], sizes = [8, 32], strides = [1, 1]} : vector<8x128xf32> to vector<8x32xf32>
    %266 = vector.extract_strided_slice %262 {offsets = [0, 96], sizes = [8, 32], strides = [1, 1]} : vector<8x128xf32> to vector<8x32xf32>
    %267 = arith.mulf %264, %243 : vector<8x32xf32>
    %268 = arith.mulf %263, %265 : vector<8x32xf32>
    %269 = arith.addf %267, %268 : vector<8x32xf32>
    %270 = math.tanh %269 : vector<8x32xf32>
    %271 = arith.mulf %266, %270 : vector<8x32xf32>
    %272 = arith.truncf %271 : vector<8x32xf32> to vector<8x32xbf16>
    %273 = arith.index_cast %245 : i32 to index
    %c0_88 = arith.constant 0 : index
    %274 = vector.load %arg12[%273, %c0_88] : memref<56x32xbf16, #tpu.memory_space<vmem>>, vector<8x32xbf16>
    tpu.vector_store %arg12[%273, %c0_88], %272 {strides = array<i32>} : memref<56x32xbf16, #tpu.memory_space<vmem>>, vector<8x32xbf16>,
    %c1_i32_89 = arith.constant 1 : i32
    %c8_i32_90 = arith.constant 8 : i32
    %275 = arith.muli %c1_i32_89, %c8_i32_90 : i32
    %276 = tpu.assume_multiple %275, 8 : i32
    %277 = arith.index_cast %276 : i32 to index
    %c0_91 = arith.constant 0 : index
    %278 = vector.load %arg11[%277, %c0_91] : memref<56x128xf32, #tpu.memory_space<vmem>>, vector<8x128xf32>
    %cst_92 = arith.constant dense<0.000000e+00> : vector<8x128xf32>
    %279 = tpu.matmul %272, %235, %cst_92 {dimension_numbers = #tpu.dot_dimension_numbers<[1], [0], [0], [1], [0, 0, 1, 1], [], []>} : vector<8x32xbf16>, vector<32x128xbf16>, vector<8x128xf32> -> vector<8x128xf32>
    %280 = arith.addf %278, %279 : vector<8x128xf32>
    %cst_93 = arith.constant 2.000000e+00 : f32
    %281 = vector.broadcast %cst_93 : f32 to vector<8x128xf32>
    %282 = arith.mulf %281, %280 : vector<8x128xf32>
    %283 = arith.select %5, %282, %280 : vector<8x128xi1>, vector<8x128xf32>
    %284 = arith.negf %283 : vector<8x128xf32>
    %285 = math.exp %284 : vector<8x128xf32>
    %cst_94 = arith.constant 1.000000e+00 : f32
    %286 = vector.broadcast %cst_94 : f32 to vector<8x128xf32>
    %287 = arith.addf %286, %285 : vector<8x128xf32>
    %288 = arith.divf %286, %287 : vector<8x128xf32>
    %cst_95 = arith.constant 2.000000e+00 : f32
    %289 = vector.broadcast %cst_95 : f32 to vector<8x128xf32>
    %290 = arith.mulf %289, %288 : vector<8x128xf32>
    %cst_96 = arith.constant 1.000000e+00 : f32
    %291 = vector.broadcast %cst_96 : f32 to vector<8x128xf32>
    %292 = arith.subf %290, %291 : vector<8x128xf32>
    %293 = arith.select %5, %292, %288 : vector<8x128xi1>, vector<8x128xf32>
    %294 = vector.extract_strided_slice %293 {offsets = [0, 0], sizes = [8, 32], strides = [1, 1]} : vector<8x128xf32> to vector<8x32xf32>
    %295 = vector.extract_strided_slice %293 {offsets = [0, 32], sizes = [8, 32], strides = [1, 1]} : vector<8x128xf32> to vector<8x32xf32>
    %296 = vector.extract_strided_slice %293 {offsets = [0, 64], sizes = [8, 32], strides = [1, 1]} : vector<8x128xf32> to vector<8x32xf32>
    %297 = vector.extract_strided_slice %293 {offsets = [0, 96], sizes = [8, 32], strides = [1, 1]} : vector<8x128xf32> to vector<8x32xf32>
    %298 = arith.mulf %295, %269 : vector<8x32xf32>
    %299 = arith.mulf %294, %296 : vector<8x32xf32>
    %300 = arith.addf %298, %299 : vector<8x32xf32>
    %301 = math.tanh %300 : vector<8x32xf32>
    %302 = arith.mulf %297, %301 : vector<8x32xf32>
    %303 = arith.truncf %302 : vector<8x32xf32> to vector<8x32xbf16>
    %304 = arith.index_cast %276 : i32 to index
    %c0_97 = arith.constant 0 : index
    %305 = vector.load %arg12[%304, %c0_97] : memref<56x32xbf16, #tpu.memory_space<vmem>>, vector<8x32xbf16>
    tpu.vector_store %arg12[%304, %c0_97], %303 {strides = array<i32>} : memref<56x32xbf16, #tpu.memory_space<vmem>>, vector<8x32xbf16>,
    %c2_i32_98 = arith.constant 2 : i32
    %c8_i32_99 = arith.constant 8 : i32
    %306 = arith.muli %c2_i32_98, %c8_i32_99 : i32
    %307 = tpu.assume_multiple %306, 8 : i32
    %308 = arith.index_cast %307 : i32 to index
    %c0_100 = arith.constant 0 : index
    %309 = vector.load %arg11[%308, %c0_100] : memref<56x128xf32, #tpu.memory_space<vmem>>, vector<8x128xf32>
    %cst_101 = arith.constant dense<0.000000e+00> : vector<8x128xf32>
    %310 = tpu.matmul %303, %235, %cst_101 {dimension_numbers = #tpu.dot_dimension_numbers<[1], [0], [0], [1], [0, 0, 1, 1], [], []>} : vector<8x32xbf16>, vector<32x128xbf16>, vector<8x128xf32> -> vector<8x128xf32>
    %311 = arith.addf %309, %310 : vector<8x128xf32>
    %cst_102 = arith.constant 2.000000e+00 : f32
    %312 = vector.broadcast %cst_102 : f32 to vector<8x128xf32>
    %313 = arith.mulf %312, %311 : vector<8x128xf32>
    %314 = arith.select %5, %313, %311 : vector<8x128xi1>, vector<8x128xf32>
    %315 = arith.negf %314 : vector<8x128xf32>
    %316 = math.exp %315 : vector<8x128xf32>
    %cst_103 = arith.constant 1.000000e+00 : f32
    %317 = vector.broadcast %cst_103 : f32 to vector<8x128xf32>
    %318 = arith.addf %317, %316 : vector<8x128xf32>
    %319 = arith.divf %317, %318 : vector<8x128xf32>
    %cst_104 = arith.constant 2.000000e+00 : f32
    %320 = vector.broadcast %cst_104 : f32 to vector<8x128xf32>
    %321 = arith.mulf %320, %319 : vector<8x128xf32>
    %cst_105 = arith.constant 1.000000e+00 : f32
    %322 = vector.broadcast %cst_105 : f32 to vector<8x128xf32>
    %323 = arith.subf %321, %322 : vector<8x128xf32>
    %324 = arith.select %5, %323, %319 : vector<8x128xi1>, vector<8x128xf32>
    %325 = vector.extract_strided_slice %324 {offsets = [0, 0], sizes = [8, 32], strides = [1, 1]} : vector<8x128xf32> to vector<8x32xf32>
    %326 = vector.extract_strided_slice %324 {offsets = [0, 32], sizes = [8, 32], strides = [1, 1]} : vector<8x128xf32> to vector<8x32xf32>
    %327 = vector.extract_strided_slice %324 {offsets = [0, 64], sizes = [8, 32], strides = [1, 1]} : vector<8x128xf32> to vector<8x32xf32>
    %328 = vector.extract_strided_slice %324 {offsets = [0, 96], sizes = [8, 32], strides = [1, 1]} : vector<8x128xf32> to vector<8x32xf32>
    %329 = arith.mulf %326, %300 : vector<8x32xf32>
    %330 = arith.mulf %325, %327 : vector<8x32xf32>
    %331 = arith.addf %329, %330 : vector<8x32xf32>
    %332 = math.tanh %331 : vector<8x32xf32>
    %333 = arith.mulf %328, %332 : vector<8x32xf32>
    %334 = arith.truncf %333 : vector<8x32xf32> to vector<8x32xbf16>
    %335 = arith.index_cast %307 : i32 to index
    %c0_106 = arith.constant 0 : index
    %336 = vector.load %arg12[%335, %c0_106] : memref<56x32xbf16, #tpu.memory_space<vmem>>, vector<8x32xbf16>
    tpu.vector_store %arg12[%335, %c0_106], %334 {strides = array<i32>} : memref<56x32xbf16, #tpu.memory_space<vmem>>, vector<8x32xbf16>,
    %c3_i32_107 = arith.constant 3 : i32
    %c8_i32_108 = arith.constant 8 : i32
    %337 = arith.muli %c3_i32_107, %c8_i32_108 : i32
    %338 = tpu.assume_multiple %337, 8 : i32
    %339 = arith.index_cast %338 : i32 to index
    %c0_109 = arith.constant 0 : index
    %340 = vector.load %arg11[%339, %c0_109] : memref<56x128xf32, #tpu.memory_space<vmem>>, vector<8x128xf32>
    %cst_110 = arith.constant dense<0.000000e+00> : vector<8x128xf32>
    %341 = tpu.matmul %334, %235, %cst_110 {dimension_numbers = #tpu.dot_dimension_numbers<[1], [0], [0], [1], [0, 0, 1, 1], [], []>} : vector<8x32xbf16>, vector<32x128xbf16>, vector<8x128xf32> -> vector<8x128xf32>
    %342 = arith.addf %340, %341 : vector<8x128xf32>
    %cst_111 = arith.constant 2.000000e+00 : f32
    %343 = vector.broadcast %cst_111 : f32 to vector<8x128xf32>
    %344 = arith.mulf %343, %342 : vector<8x128xf32>
    %345 = arith.select %5, %344, %342 : vector<8x128xi1>, vector<8x128xf32>
    %346 = arith.negf %345 : vector<8x128xf32>
    %347 = math.exp %346 : vector<8x128xf32>
    %cst_112 = arith.constant 1.000000e+00 : f32
    %348 = vector.broadcast %cst_112 : f32 to vector<8x128xf32>
    %349 = arith.addf %348, %347 : vector<8x128xf32>
    %350 = arith.divf %348, %349 : vector<8x128xf32>
    %cst_113 = arith.constant 2.000000e+00 : f32
    %351 = vector.broadcast %cst_113 : f32 to vector<8x128xf32>
    %352 = arith.mulf %351, %350 : vector<8x128xf32>
    %cst_114 = arith.constant 1.000000e+00 : f32
    %353 = vector.broadcast %cst_114 : f32 to vector<8x128xf32>
    %354 = arith.subf %352, %353 : vector<8x128xf32>
    %355 = arith.select %5, %354, %350 : vector<8x128xi1>, vector<8x128xf32>
    %356 = vector.extract_strided_slice %355 {offsets = [0, 0], sizes = [8, 32], strides = [1, 1]} : vector<8x128xf32> to vector<8x32xf32>
    %357 = vector.extract_strided_slice %355 {offsets = [0, 32], sizes = [8, 32], strides = [1, 1]} : vector<8x128xf32> to vector<8x32xf32>
    %358 = vector.extract_strided_slice %355 {offsets = [0, 64], sizes = [8, 32], strides = [1, 1]} : vector<8x128xf32> to vector<8x32xf32>
    %359 = vector.extract_strided_slice %355 {offsets = [0, 96], sizes = [8, 32], strides = [1, 1]} : vector<8x128xf32> to vector<8x32xf32>
    %360 = arith.mulf %357, %331 : vector<8x32xf32>
    %361 = arith.mulf %356, %358 : vector<8x32xf32>
    %362 = arith.addf %360, %361 : vector<8x32xf32>
    %363 = math.tanh %362 : vector<8x32xf32>
    %364 = arith.mulf %359, %363 : vector<8x32xf32>
    %365 = arith.truncf %364 : vector<8x32xf32> to vector<8x32xbf16>
    %366 = arith.index_cast %338 : i32 to index
    %c0_115 = arith.constant 0 : index
    %367 = vector.load %arg12[%366, %c0_115] : memref<56x32xbf16, #tpu.memory_space<vmem>>, vector<8x32xbf16>
    tpu.vector_store %arg12[%366, %c0_115], %365 {strides = array<i32>} : memref<56x32xbf16, #tpu.memory_space<vmem>>, vector<8x32xbf16>,
    %c4_i32_116 = arith.constant 4 : i32
    %c8_i32_117 = arith.constant 8 : i32
    %368 = arith.muli %c4_i32_116, %c8_i32_117 : i32
    %369 = tpu.assume_multiple %368, 8 : i32
    %370 = arith.index_cast %369 : i32 to index
    %c0_118 = arith.constant 0 : index
    %371 = vector.load %arg11[%370, %c0_118] : memref<56x128xf32, #tpu.memory_space<vmem>>, vector<8x128xf32>
    %cst_119 = arith.constant dense<0.000000e+00> : vector<8x128xf32>
    %372 = tpu.matmul %365, %235, %cst_119 {dimension_numbers = #tpu.dot_dimension_numbers<[1], [0], [0], [1], [0, 0, 1, 1], [], []>} : vector<8x32xbf16>, vector<32x128xbf16>, vector<8x128xf32> -> vector<8x128xf32>
    %373 = arith.addf %371, %372 : vector<8x128xf32>
    %cst_120 = arith.constant 2.000000e+00 : f32
    %374 = vector.broadcast %cst_120 : f32 to vector<8x128xf32>
    %375 = arith.mulf %374, %373 : vector<8x128xf32>
    %376 = arith.select %5, %375, %373 : vector<8x128xi1>, vector<8x128xf32>
    %377 = arith.negf %376 : vector<8x128xf32>
    %378 = math.exp %377 : vector<8x128xf32>
    %cst_121 = arith.constant 1.000000e+00 : f32
    %379 = vector.broadcast %cst_121 : f32 to vector<8x128xf32>
    %380 = arith.addf %379, %378 : vector<8x128xf32>
    %381 = arith.divf %379, %380 : vector<8x128xf32>
    %cst_122 = arith.constant 2.000000e+00 : f32
    %382 = vector.broadcast %cst_122 : f32 to vector<8x128xf32>
    %383 = arith.mulf %382, %381 : vector<8x128xf32>
    %cst_123 = arith.constant 1.000000e+00 : f32
    %384 = vector.broadcast %cst_123 : f32 to vector<8x128xf32>
    %385 = arith.subf %383, %384 : vector<8x128xf32>
    %386 = arith.select %5, %385, %381 : vector<8x128xi1>, vector<8x128xf32>
    %387 = vector.extract_strided_slice %386 {offsets = [0, 0], sizes = [8, 32], strides = [1, 1]} : vector<8x128xf32> to vector<8x32xf32>
    %388 = vector.extract_strided_slice %386 {offsets = [0, 32], sizes = [8, 32], strides = [1, 1]} : vector<8x128xf32> to vector<8x32xf32>
    %389 = vector.extract_strided_slice %386 {offsets = [0, 64], sizes = [8, 32], strides = [1, 1]} : vector<8x128xf32> to vector<8x32xf32>
    %390 = vector.extract_strided_slice %386 {offsets = [0, 96], sizes = [8, 32], strides = [1, 1]} : vector<8x128xf32> to vector<8x32xf32>
    %391 = arith.mulf %388, %362 : vector<8x32xf32>
    %392 = arith.mulf %387, %389 : vector<8x32xf32>
    %393 = arith.addf %391, %392 : vector<8x32xf32>
    %394 = math.tanh %393 : vector<8x32xf32>
    %395 = arith.mulf %390, %394 : vector<8x32xf32>
    %396 = arith.truncf %395 : vector<8x32xf32> to vector<8x32xbf16>
    %397 = arith.index_cast %369 : i32 to index
    %c0_124 = arith.constant 0 : index
    %398 = vector.load %arg12[%397, %c0_124] : memref<56x32xbf16, #tpu.memory_space<vmem>>, vector<8x32xbf16>
    tpu.vector_store %arg12[%397, %c0_124], %396 {strides = array<i32>} : memref<56x32xbf16, #tpu.memory_space<vmem>>, vector<8x32xbf16>,
    %c5_i32_125 = arith.constant 5 : i32
    %c8_i32_126 = arith.constant 8 : i32
    %399 = arith.muli %c5_i32_125, %c8_i32_126 : i32
    %400 = tpu.assume_multiple %399, 8 : i32
    %401 = arith.index_cast %400 : i32 to index
    %c0_127 = arith.constant 0 : index
    %402 = vector.load %arg11[%401, %c0_127] : memref<56x128xf32, #tpu.memory_space<vmem>>, vector<8x128xf32>
    %cst_128 = arith.constant dense<0.000000e+00> : vector<8x128xf32>
    %403 = tpu.matmul %396, %235, %cst_128 {dimension_numbers = #tpu.dot_dimension_numbers<[1], [0], [0], [1], [0, 0, 1, 1], [], []>} : vector<8x32xbf16>, vector<32x128xbf16>, vector<8x128xf32> -> vector<8x128xf32>
    %404 = arith.addf %402, %403 : vector<8x128xf32>
    %cst_129 = arith.constant 2.000000e+00 : f32
    %405 = vector.broadcast %cst_129 : f32 to vector<8x128xf32>
    %406 = arith.mulf %405, %404 : vector<8x128xf32>
    %407 = arith.select %5, %406, %404 : vector<8x128xi1>, vector<8x128xf32>
    %408 = arith.negf %407 : vector<8x128xf32>
    %409 = math.exp %408 : vector<8x128xf32>
    %cst_130 = arith.constant 1.000000e+00 : f32
    %410 = vector.broadcast %cst_130 : f32 to vector<8x128xf32>
    %411 = arith.addf %410, %409 : vector<8x128xf32>
    %412 = arith.divf %410, %411 : vector<8x128xf32>
    %cst_131 = arith.constant 2.000000e+00 : f32
    %413 = vector.broadcast %cst_131 : f32 to vector<8x128xf32>
    %414 = arith.mulf %413, %412 : vector<8x128xf32>
    %cst_132 = arith.constant 1.000000e+00 : f32
    %415 = vector.broadcast %cst_132 : f32 to vector<8x128xf32>
    %416 = arith.subf %414, %415 : vector<8x128xf32>
    %417 = arith.select %5, %416, %412 : vector<8x128xi1>, vector<8x128xf32>
    %418 = vector.extract_strided_slice %417 {offsets = [0, 0], sizes = [8, 32], strides = [1, 1]} : vector<8x128xf32> to vector<8x32xf32>
    %419 = vector.extract_strided_slice %417 {offsets = [0, 32], sizes = [8, 32], strides = [1, 1]} : vector<8x128xf32> to vector<8x32xf32>
    %420 = vector.extract_strided_slice %417 {offsets = [0, 64], sizes = [8, 32], strides = [1, 1]} : vector<8x128xf32> to vector<8x32xf32>
    %421 = vector.extract_strided_slice %417 {offsets = [0, 96], sizes = [8, 32], strides = [1, 1]} : vector<8x128xf32> to vector<8x32xf32>
    %422 = arith.mulf %419, %393 : vector<8x32xf32>
    %423 = arith.mulf %418, %420 : vector<8x32xf32>
    %424 = arith.addf %422, %423 : vector<8x32xf32>
    %425 = math.tanh %424 : vector<8x32xf32>
    %426 = arith.mulf %421, %425 : vector<8x32xf32>
    %427 = arith.truncf %426 : vector<8x32xf32> to vector<8x32xbf16>
    %428 = arith.index_cast %400 : i32 to index
    %c0_133 = arith.constant 0 : index
    %429 = vector.load %arg12[%428, %c0_133] : memref<56x32xbf16, #tpu.memory_space<vmem>>, vector<8x32xbf16>
    tpu.vector_store %arg12[%428, %c0_133], %427 {strides = array<i32>} : memref<56x32xbf16, #tpu.memory_space<vmem>>, vector<8x32xbf16>,
    %c6_i32_134 = arith.constant 6 : i32
    %c8_i32_135 = arith.constant 8 : i32
    %430 = arith.muli %c6_i32_134, %c8_i32_135 : i32
    %431 = tpu.assume_multiple %430, 8 : i32
    %432 = arith.index_cast %431 : i32 to index
    %c0_136 = arith.constant 0 : index
    %433 = vector.load %arg11[%432, %c0_136] : memref<56x128xf32, #tpu.memory_space<vmem>>, vector<8x128xf32>
    %cst_137 = arith.constant dense<0.000000e+00> : vector<8x128xf32>
    %434 = tpu.matmul %427, %235, %cst_137 {dimension_numbers = #tpu.dot_dimension_numbers<[1], [0], [0], [1], [0, 0, 1, 1], [], []>} : vector<8x32xbf16>, vector<32x128xbf16>, vector<8x128xf32> -> vector<8x128xf32>
    %435 = arith.addf %433, %434 : vector<8x128xf32>
    %cst_138 = arith.constant 2.000000e+00 : f32
    %436 = vector.broadcast %cst_138 : f32 to vector<8x128xf32>
    %437 = arith.mulf %436, %435 : vector<8x128xf32>
    %438 = arith.select %5, %437, %435 : vector<8x128xi1>, vector<8x128xf32>
    %439 = arith.negf %438 : vector<8x128xf32>
    %440 = math.exp %439 : vector<8x128xf32>
    %cst_139 = arith.constant 1.000000e+00 : f32
    %441 = vector.broadcast %cst_139 : f32 to vector<8x128xf32>
    %442 = arith.addf %441, %440 : vector<8x128xf32>
    %443 = arith.divf %441, %442 : vector<8x128xf32>
    %cst_140 = arith.constant 2.000000e+00 : f32
    %444 = vector.broadcast %cst_140 : f32 to vector<8x128xf32>
    %445 = arith.mulf %444, %443 : vector<8x128xf32>
    %cst_141 = arith.constant 1.000000e+00 : f32
    %446 = vector.broadcast %cst_141 : f32 to vector<8x128xf32>
    %447 = arith.subf %445, %446 : vector<8x128xf32>
    %448 = arith.select %5, %447, %443 : vector<8x128xi1>, vector<8x128xf32>
    %449 = vector.extract_strided_slice %448 {offsets = [0, 0], sizes = [8, 32], strides = [1, 1]} : vector<8x128xf32> to vector<8x32xf32>
    %450 = vector.extract_strided_slice %448 {offsets = [0, 32], sizes = [8, 32], strides = [1, 1]} : vector<8x128xf32> to vector<8x32xf32>
    %451 = vector.extract_strided_slice %448 {offsets = [0, 64], sizes = [8, 32], strides = [1, 1]} : vector<8x128xf32> to vector<8x32xf32>
    %452 = vector.extract_strided_slice %448 {offsets = [0, 96], sizes = [8, 32], strides = [1, 1]} : vector<8x128xf32> to vector<8x32xf32>
    %453 = arith.mulf %450, %424 : vector<8x32xf32>
    %454 = arith.mulf %449, %451 : vector<8x32xf32>
    %455 = arith.addf %453, %454 : vector<8x32xf32>
    %456 = math.tanh %455 : vector<8x32xf32>
    %457 = arith.mulf %452, %456 : vector<8x32xf32>
    %458 = arith.truncf %457 : vector<8x32xf32> to vector<8x32xbf16>
    %459 = arith.index_cast %431 : i32 to index
    %c0_142 = arith.constant 0 : index
    %460 = vector.load %arg12[%459, %c0_142] : memref<56x32xbf16, #tpu.memory_space<vmem>>, vector<8x32xbf16>
    tpu.vector_store %arg12[%459, %c0_142], %458 {strides = array<i32>} : memref<56x32xbf16, #tpu.memory_space<vmem>>, vector<8x32xbf16>,
    %c7_i32_143 = arith.constant 7 : i32
    %c0_144 = arith.constant 0 : index
    %c0_145 = arith.constant 0 : index
    %461 = vector.load %arg12[%c0_144, %c0_145] : memref<56x32xbf16, #tpu.memory_space<vmem>>, vector<56x32xbf16>
    %c0_146 = arith.constant 0 : index
    %c0_147 = arith.constant 0 : index
    %462 = vector.load %arg8[%c0_146, %c0_147] : memref<32x128xbf16, #tpu.memory_space<vmem>>, vector<32x128xbf16>
    %cst_148 = arith.constant dense<0.000000e+00> : vector<56x128xf32>
    %463 = tpu.matmul %461, %462, %cst_148 {dimension_numbers = #tpu.dot_dimension_numbers<[1], [0], [0], [1], [0, 0, 1, 1], [], []>} : vector<56x32xbf16>, vector<32x128xbf16>, vector<56x128xf32> -> vector<56x128xf32>
    %c0_149 = arith.constant 0 : index
    %c0_150 = arith.constant 0 : index
    %464 = vector.load %arg9[%c0_149, %c0_150] : memref<1x128xf32, #tpu.memory_space<vmem>>, vector<1x128xf32>
    %465 = vector.broadcast %464 : vector<1x128xf32> to vector<56x128xf32>
    %466 = arith.addf %463, %465 : vector<56x128xf32>
    %c0_151 = arith.constant 0 : index
    %c0_152 = arith.constant 0 : index
    %c0_153 = arith.constant 0 : index
    %467 = vector.load %arg10[%c0_151, %c0_152, %c0_153] : memref<1x56x128xf32, #tpu.memory_space<vmem>>, vector<1x56x128xf32>
    %468 = vector.shape_cast %467 : vector<1x56x128xf32> to vector<56x128xf32>
    %469 = vector.shape_cast %466 : vector<56x128xf32> to vector<1x56x128xf32>
    tpu.vector_store %arg10[%c0_151, %c0_152, %c0_153], %469 {strides = array<i32>} : memref<1x56x128xf32, #tpu.memory_space<vmem>>, vector<1x56x128xf32>,
    return
  }
  func.func @transform_0(%arg0: i32) -> (i32, i32, i32) {
    %c0_i32 = arith.constant 0 : i32
    %c0_i32_0 = arith.constant 0 : i32
    %c0_i32_1 = arith.constant 0 : i32
    return %arg0, %c0_i32, %c0_i32_0 : i32, i32, i32
  }
  func.func @transform_1(%arg0: i32) -> (i32, i32) {
    %c0_i32 = arith.constant 0 : i32
    %c0_i32_0 = arith.constant 0 : i32
    %c0_i32_1 = arith.constant 0 : i32
    return %c0_i32, %c0_i32_0 : i32, i32
  }
  func.func @transform_2(%arg0: i32) -> (i32, i32) {
    %c0_i32 = arith.constant 0 : i32
    %c0_i32_0 = arith.constant 0 : i32
    %c0_i32_1 = arith.constant 0 : i32
    return %c0_i32, %c0_i32_0 : i32, i32
  }
  func.func @transform_3(%arg0: i32) -> (i32, i32) {
    %c0_i32 = arith.constant 0 : i32
    %c0_i32_0 = arith.constant 0 : i32
    %c0_i32_1 = arith.constant 0 : i32
    return %c0_i32, %c0_i32_0 : i32, i32
  }
  func.func @transform_4(%arg0: i32) -> (i32, i32) {
    %c0_i32 = arith.constant 0 : i32
    %c0_i32_0 = arith.constant 0 : i32
    %c0_i32_1 = arith.constant 0 : i32
    return %c0_i32, %c0_i32_0 : i32, i32
  }
  func.func @transform_5(%arg0: i32) -> (i32, i32) {
    %c0_i32 = arith.constant 0 : i32
    %c0_i32_0 = arith.constant 0 : i32
    %c0_i32_1 = arith.constant 0 : i32
    return %c0_i32, %c0_i32_0 : i32, i32
  }
  func.func @transform_6(%arg0: i32) -> (i32, i32) {
    %c0_i32 = arith.constant 0 : i32
    %c0_i32_0 = arith.constant 0 : i32
    %c0_i32_1 = arith.constant 0 : i32
    return %c0_i32, %c0_i32_0 : i32, i32
  }
  func.func @transform_7(%arg0: i32) -> (i32, i32) {
    %c0_i32 = arith.constant 0 : i32
    %c0_i32_0 = arith.constant 0 : i32
    %c0_i32_1 = arith.constant 0 : i32
    return %c0_i32, %c0_i32_0 : i32, i32
  }
  func.func @transform_8(%arg0: i32) -> (i32, i32) {
    %c0_i32 = arith.constant 0 : i32
    %c0_i32_0 = arith.constant 0 : i32
    %c0_i32_1 = arith.constant 0 : i32
    return %c0_i32, %c0_i32_0 : i32, i32
  }
  func.func @transform_9(%arg0: i32) -> (i32, i32, i32) {
    %c0_i32 = arith.constant 0 : i32
    %c0_i32_0 = arith.constant 0 : i32
    %c0_i32_1 = arith.constant 0 : i32
    return %arg0, %c0_i32, %c0_i32_0 : i32, i32, i32
  }
}

</mosaic_0001>

<llo_original>
// kernel: decoder_rnn_forward.1
$region0: #{decoder_rnn_forward.1}
  #allocation0 [shape = 'u32[]', space=smem, size = 0x4, offset = 0x4, fixed_abs, tag = 'smem constant byte address 0x4 - core index']
  #allocation1 [shape = 'u32[144,128]{1,0:T(1,128)}', space=vmem, size = 0x12000, scoped, tag = 'internal scratch']
  #allocation2 [shape = 'f32[56,128]{1,0:T(8,128)}', space=vmem, size = 0x7000, scoped, tag = 'scratch operand']
  #allocation3 [shape = 'bf16[56,32]{1,0:T(8,128)(2,1)}', space=vmem, size = 0x3800, scoped, tag = 'scratch operand']
  %s0 = inlined_call_operand.vmem [shape: bf16[2,56,32], index: 0, kind: input, shape index: {}]
  %s1 = inlined_call_operand.vmem [shape: bf16[32,128], index: 1, kind: input, shape index: {}]
  %s2 = inlined_call_operand.vmem [shape: bf16[32,128], index: 2, kind: input, shape index: {}]
  %s3 = inlined_call_operand.vmem [shape: f32[1,128], index: 3, kind: input, shape index: {}]
  %s4 = inlined_call_operand.vmem [shape: bf16[32,128], index: 4, kind: input, shape index: {}]
  %s5 = inlined_call_operand.vmem [shape: bf16[32,128], index: 5, kind: input, shape index: {}]
  %s6 = inlined_call_operand.vmem [shape: f32[1,128], index: 6, kind: input, shape index: {}]
  %s7 = inlined_call_operand.vmem [shape: bf16[32,128], index: 7, kind: input, shape index: {}]
  %s8 = inlined_call_operand.vmem [shape: f32[1,128], index: 8, kind: input, shape index: {}]
  %s9 = inlined_call_operand.vmem [shape: f32[2,56,128], index: 9, kind: output, shape index: {}]
  %s10 = sld [smem:[#allocation0]]
  $region69: #{decoder_rnn_forward.1} parent=0
    _
  %s12 = ssub.s32 1, %s10
  %s13 = scalar_select 0, %s12, %s10
  loop: start=0, step=1, limit=4
  $region2: #{decoder_rnn_forward.1} parent=0 // loop_pre_header
    _
  $region3: #{decoder_rnn_forward.1} parent=0 // loop_header
    %s15 = sphi 0, %s19
    %p16 = scmp.ge.s32.totalorder %s15, 4
    %s25 = sphi 0, %s27
    %s28 = sphi 0, %s25
    %s29 = sphi 0, %s28
    %s45 = sphi 0, %s29
    %s49 = sphi 0, %s49
    %s51 = sphi 0, %s49
    %s52 = sphi 0, %s51
    %s66 = sphi 0, %s52
    %s70 = sphi 0, %s70
    %s72 = sphi 0, %s70
    %s73 = sphi 0, %s72
    %s87 = sphi 0, %s73
    %s91 = sphi 0, %s91
    %s93 = sphi 0, %s91
    %s94 = sphi 0, %s93
    %s108 = sphi 0, %s94
    %s112 = sphi 0, %s112
    %s114 = sphi 0, %s112
    %s115 = sphi 0, %s114
    %s129 = sphi 0, %s115
    %s133 = sphi 0, %s133
    %s135 = sphi 0, %s133
    %s136 = sphi 0, %s135
    %s150 = sphi 0, %s136
    %s154 = sphi 0, %s154
    %s156 = sphi 0, %s154
    %s157 = sphi 0, %s156
    %s171 = sphi 0, %s157
    %s175 = sphi 0, %s175
    %s177 = sphi 0, %s175
    %s178 = sphi 0, %s177
    %s192 = sphi 0, %s178
    %s196 = sphi 0, %s196
    %s198 = sphi 0, %s196
    %s199 = sphi 0, %s198
    %s213 = sphi 0, %s199
    %s219 = sphi 0, %s221
    %s222 = sphi 0, %s219
    %s223 = sphi 0, %s222
    %s239 = sphi 0, %s223
  $region4: #{decoder_rnn_forward.1} parent=0 // loop_header_branch
    %18 = sbr.rel (%p16) target = $region8
  $region5: #{decoder_rnn_forward.1} parent=0 // loop_body
    %s20 = ssub.s32 %s15, 1
    %s21 = ssub.s32 %s15, 2
    %s22 = sadd.s32 %s15, 1
    %s23 = ssub.s32 %s15, %s22
    %p24 = scmp.eq.s32.totalorder %s23, 0
    %s26 = sadd.s32 %s25, 1
    %s27 = scalar_select %p24, %s25, %s26
    %p30 = pneg %p24
    %p31 = scmp.eq.s32.totalorder %s15, 1
    %p32 = por %p30, %p31
    %p33 = scmp.ne.s32.totalorder %s25, %s28
    %p34 = scmp.eq.s32.totalorder %s15, 0
    %p35 = por %p33, %p34
    %p36 = scmp.ne.s32.totalorder %s25, %s28
    %p37 = scmp.eq.s32.totalorder %s20, 1
    %p38 = por %p36, %p37
    %p39 = scmp.ne.s32.totalorder %s28, %s29
    %p40 = scmp.eq.s32.totalorder %s20, 0
    %p41 = por %p39, %p40
    %p42 = scmp.ne.s32.totalorder %s28, %s29
    %p43 = scmp.eq.s32.totalorder %s21, 1
    %p44 = por %p42, %p43
    %p46 = scmp.ne.s32.totalorder %s29, %s45
    %p47 = scmp.eq.s32.totalorder %s21, 0
    %p48 = por %p46, %p47
    %s50 = sadd.s32 %s49, 1
    %p53 = scmp.eq.s32.totalorder %s15, 1
    %p54 = scmp.ne.s32.totalorder %s49, %s51
    %p55 = scmp.eq.s32.totalorder %s15, 0
    %p56 = por %p54, %p55
    %p57 = scmp.ne.s32.totalorder %s49, %s51
    %p58 = scmp.eq.s32.totalorder %s20, 1
    %p59 = por %p57, %p58
    %p60 = scmp.ne.s32.totalorder %s51, %s52
    %p61 = scmp.eq.s32.totalorder %s20, 0
    %p62 = por %p60, %p61
    %p63 = scmp.ne.s32.totalorder %s51, %s52
    %p64 = scmp.eq.s32.totalorder %s21, 1
    %p65 = por %p63, %p64
    %p67 = scmp.ne.s32.totalorder %s52, %s66
    %p68 = scmp.eq.s32.totalorder %s21, 0
    %p69 = por %p67, %p68
    %s71 = sadd.s32 %s70, 1
    %p74 = scmp.eq.s32.totalorder %s15, 1
    %p75 = scmp.ne.s32.totalorder %s70, %s72
    %p76 = scmp.eq.s32.totalorder %s15, 0
    %p77 = por %p75, %p76
    %p78 = scmp.ne.s32.totalorder %s70, %s72
    %p79 = scmp.eq.s32.totalorder %s20, 1
    %p80 = por %p78, %p79
    %p81 = scmp.ne.s32.totalorder %s72, %s73
    %p82 = scmp.eq.s32.totalorder %s20, 0
    %p83 = por %p81, %p82
    %p84 = scmp.ne.s32.totalorder %s72, %s73
    %p85 = scmp.eq.s32.totalorder %s21, 1
    %p86 = por %p84, %p85
    %p88 = scmp.ne.s32.totalorder %s73, %s87
    %p89 = scmp.eq.s32.totalorder %s21, 0
    %p90 = por %p88, %p89
    %s92 = sadd.s32 %s91, 1
    %p95 = scmp.eq.s32.totalorder %s15, 1
    %p96 = scmp.ne.s32.totalorder %s91, %s93
    %p97 = scmp.eq.s32.totalorder %s15, 0
    %p98 = por %p96, %p97
    %p99 = scmp.ne.s32.totalorder %s91, %s93
    %p100 = scmp.eq.s32.totalorder %s20, 1
    %p101 = por %p99, %p100
    %p102 = scmp.ne.s32.totalorder %s93, %s94
    %p103 = scmp.eq.s32.totalorder %s20, 0
    %p104 = por %p102, %p103
    %p105 = scmp.ne.s32.totalorder %s93, %s94
    %p106 = scmp.eq.s32.totalorder %s21, 1
    %p107 = por %p105, %p106
    %p109 = scmp.ne.s32.totalorder %s94, %s108
    %p110 = scmp.eq.s32.totalorder %s21, 0
    %p111 = por %p109, %p110
    %s113 = sadd.s32 %s112, 1
    %p116 = scmp.eq.s32.totalorder %s15, 1
    %p117 = scmp.ne.s32.totalorder %s112, %s114
    %p118 = scmp.eq.s32.totalorder %s15, 0
    %p119 = por %p117, %p118
    %p120 = scmp.ne.s32.totalorder %s112, %s114
    %p121 = scmp.eq.s32.totalorder %s20, 1
    %p122 = por %p120, %p121
    %p123 = scmp.ne.s32.totalorder %s114, %s115
    %p124 = scmp.eq.s32.totalorder %s20, 0
    %p125 = por %p123, %p124
    %p126 = scmp.ne.s32.totalorder %s114, %s115
    %p127 = scmp.eq.s32.totalorder %s21, 1
    %p128 = por %p126, %p127
    %p130 = scmp.ne.s32.totalorder %s115, %s129
    %p131 = scmp.eq.s32.totalorder %s21, 0
    %p132 = por %p130, %p131
    %s134 = sadd.s32 %s133, 1
    %p137 = scmp.eq.s32.totalorder %s15, 1
    %p138 = scmp.ne.s32.totalorder %s133, %s135
    %p139 = scmp.eq.s32.totalorder %s15, 0
    %p140 = por %p138, %p139
    %p141 = scmp.ne.s32.totalorder %s133, %s135
    %p142 = scmp.eq.s32.totalorder %s20, 1
    %p143 = por %p141, %p142
    %p144 = scmp.ne.s32.totalorder %s135, %s136
    %p145 = scmp.eq.s32.totalorder %s20, 0
    %p146 = por %p144, %p145
    %p147 = scmp.ne.s32.totalorder %s135, %s136
    %p148 = scmp.eq.s32.totalorder %s21, 1
    %p149 = por %p147, %p148
    %p151 = scmp.ne.s32.totalorder %s136, %s150
    %p152 = scmp.eq.s32.totalorder %s21, 0
    %p153 = por %p151, %p152
    %s155 = sadd.s32 %s154, 1
    %p158 = scmp.eq.s32.totalorder %s15, 1
    %p159 = scmp.ne.s32.totalorder %s154, %s156
    %p160 = scmp.eq.s32.totalorder %s15, 0
    %p161 = por %p159, %p160
    %p162 = scmp.ne.s32.totalorder %s154, %s156
    %p163 = scmp.eq.s32.totalorder %s20, 1
    %p164 = por %p162, %p163
    %p165 = scmp.ne.s32.totalorder %s156, %s157
    %p166 = scmp.eq.s32.totalorder %s20, 0
    %p167 = por %p165, %p166
    %p168 = scmp.ne.s32.totalorder %s156, %s157
    %p169 = scmp.eq.s32.totalorder %s21, 1
    %p170 = por %p168, %p169
    %p172 = scmp.ne.s32.totalorder %s157, %s171
    %p173 = scmp.eq.s32.totalorder %s21, 0
    %p174 = por %p172, %p173
    %s176 = sadd.s32 %s175, 1
    %p179 = scmp.eq.s32.totalorder %s15, 1
    %p180 = scmp.ne.s32.totalorder %s175, %s177
    %p181 = scmp.eq.s32.totalorder %s15, 0
    %p182 = por %p180, %p181
    %p183 = scmp.ne.s32.totalorder %s175, %s177
    %p184 = scmp.eq.s32.totalorder %s20, 1
    %p185 = por %p183, %p184
    %p186 = scmp.ne.s32.totalorder %s177, %s178
    %p187 = scmp.eq.s32.totalorder %s20, 0
    %p188 = por %p186, %p187
    %p189 = scmp.ne.s32.totalorder %s177, %s178
    %p190 = scmp.eq.s32.totalorder %s21, 1
    %p191 = por %p189, %p190
    %p193 = scmp.ne.s32.totalorder %s178, %s192
    %p194 = scmp.eq.s32.totalorder %s21, 0
    %p195 = por %p193, %p194
    %s197 = sadd.s32 %s196, 1
    %p200 = scmp.eq.s32.totalorder %s15, 1
    %p201 = scmp.ne.s32.totalorder %s196, %s198
    %p202 = scmp.eq.s32.totalorder %s15, 0
    %p203 = por %p201, %p202
    %p204 = scmp.ne.s32.totalorder %s196, %s198
    %p205 = scmp.eq.s32.totalorder %s20, 1
    %p206 = por %p204, %p205
    %p207 = scmp.ne.s32.totalorder %s198, %s199
    %p208 = scmp.eq.s32.totalorder %s20, 0
    %p209 = por %p207, %p208
    %p210 = scmp.ne.s32.totalorder %s198, %s199
    %p211 = scmp.eq.s32.totalorder %s21, 1
    %p212 = por %p210, %p211
    %p214 = scmp.ne.s32.totalorder %s199, %s213
    %p215 = scmp.eq.s32.totalorder %s21, 0
    %p216 = por %p214, %p215
    %s217 = ssub.s32 %s15, %s22
    %p218 = scmp.eq.s32.totalorder %s217, 0
    %s220 = sadd.s32 %s219, 1
    %s221 = scalar_select %p218, %s219, %s220
    %p224 = pneg %p218
    %p225 = scmp.eq.s32.totalorder %s15, 1
    %p226 = por %p224, %p225
    %p227 = scmp.ne.s32.totalorder %s219, %s222
    %p228 = scmp.eq.s32.totalorder %s15, 0
    %p229 = por %p227, %p228
    %p230 = scmp.ne.s32.totalorder %s219, %s222
    %p231 = scmp.eq.s32.totalorder %s20, 1
    %p232 = por %p230, %p231
    %p233 = scmp.ne.s32.totalorder %s222, %s223
    %p234 = scmp.eq.s32.totalorder %s20, 0
    %p235 = por %p233, %p234
    %p236 = scmp.ne.s32.totalorder %s222, %s223
    %p237 = scmp.eq.s32.totalorder %s21, 1
    %p238 = por %p236, %p237
    %p240 = scmp.ne.s32.totalorder %s223, %s239
    %p241 = scmp.eq.s32.totalorder %s21, 0
    %p242 = por %p240, %p241
    %p243 = scmp.le.s32.totalorder 1, %s15
    %p244 = scmp.lt.s32.totalorder %s15, 3
    %p245 = pnand %p243, %p244
    %p246 = pneg %p245
    // Predicated region
    $region9: #{decoder_rnn_forward.1} parent=5 // pred_check
      _
    $region10: #{decoder_rnn_forward.1} parent=5 // pred_check_branch
      %248 = sbr.rel (%p245) target = $region12
    $region11: #{decoder_rnn_forward.1} parent=5 // pred_region
      %s249 = ssub.s32 %s15, 1
      // Predicated region
      $region13: #{decoder_rnn_forward.1} parent=11 // pred_check
        %p250 = pneg %p62
      $region14: #{decoder_rnn_forward.1} parent=11 // pred_check_branch
        %252 = sbr.rel (%p250) target = $region16
      $region15: #{decoder_rnn_forward.1} parent=11 // pred_region
        _
      $region16: #{decoder_rnn_forward.1} parent=11 // pred_fallthru
        _
      // Predicated region
      $region17: #{decoder_rnn_forward.1} parent=11 // pred_check
        %p253 = pneg %p83
      $region18: #{decoder_rnn_forward.1} parent=11 // pred_check_branch
        %255 = sbr.rel (%p253) target = $region20
      $region19: #{decoder_rnn_forward.1} parent=11 // pred_region
        _
      $region20: #{decoder_rnn_forward.1} parent=11 // pred_fallthru
        _
      // Predicated region
      $region21: #{decoder_rnn_forward.1} parent=11 // pred_check
        %p256 = pneg %p104
      $region22: #{decoder_rnn_forward.1} parent=11 // pred_check_branch
        %258 = sbr.rel (%p256) target = $region24
      $region23: #{decoder_rnn_forward.1} parent=11 // pred_region
        _
      $region24: #{decoder_rnn_forward.1} parent=11 // pred_fallthru
        _
      // Predicated region
      $region25: #{decoder_rnn_forward.1} parent=11 // pred_check
        %p259 = pneg %p125
      $region26: #{decoder_rnn_forward.1} parent=11 // pred_check_branch
        %261 = sbr.rel (%p259) target = $region28
      $region27: #{decoder_rnn_forward.1} parent=11 // pred_region
        _
      $region28: #{decoder_rnn_forward.1} parent=11 // pred_fallthru
        _
      // Predicated region
      $region29: #{decoder_rnn_forward.1} parent=11 // pred_check
        %p262 = pneg %p146
      $region30: #{decoder_rnn_forward.1} parent=11 // pred_check_branch
        %264 = sbr.rel (%p262) target = $region32
      $region31: #{decoder_rnn_forward.1} parent=11 // pred_region
        _
      $region32: #{decoder_rnn_forward.1} parent=11 // pred_fallthru
        _
      // Predicated region
      $region33: #{decoder_rnn_forward.1} parent=11 // pred_check
        %p265 = pneg %p167
      $region34: #{decoder_rnn_forward.1} parent=11 // pred_check_branch
        %267 = sbr.rel (%p265) target = $region36
      $region35: #{decoder_rnn_forward.1} parent=11 // pred_region
        _
      $region36: #{decoder_rnn_forward.1} parent=11 // pred_fallthru
        _
      // Predicated region
      $region37: #{decoder_rnn_forward.1} parent=11 // pred_check
        %p268 = pneg %p188
      $region38: #{decoder_rnn_forward.1} parent=11 // pred_check_branch
        %270 = sbr.rel (%p268) target = $region40
      $region39: #{decoder_rnn_forward.1} parent=11 // pred_region
        _
      $region40: #{decoder_rnn_forward.1} parent=11 // pred_fallthru
        _
      // Predicated region
      $region41: #{decoder_rnn_forward.1} parent=11 // pred_check
        %p271 = pneg %p209
      $region42: #{decoder_rnn_forward.1} parent=11 // pred_check_branch
        %273 = sbr.rel (%p271) target = $region44
      $region43: #{decoder_rnn_forward.1} parent=11 // pred_region
        _
      $region44: #{decoder_rnn_forward.1} parent=11 // pred_fallthru
        _
    $region12: #{decoder_rnn_forward.1} parent=5 // pred_fallthru
      _
    %p274 = scmp.lt.s32.totalorder %s15, 2
    // Predicated region
    $region45: #{decoder_rnn_forward.1} parent=5 // pred_check
      %p275 = pneg %p274
    $region46: #{decoder_rnn_forward.1} parent=5 // pred_check_branch
      %277 = sbr.rel (%p275) target = $region48
    $region47: #{decoder_rnn_forward.1} parent=5 // pred_region
      // Predicated region
      $region49: #{decoder_rnn_forward.1} parent=47 // pred_check
        %p278 = pneg %p35
      $region50: #{decoder_rnn_forward.1} parent=47 // pred_check_branch
        %280 = sbr.rel (%p278) target = $region52
      $region51: #{decoder_rnn_forward.1} parent=47 // pred_region
        %p281 = scmp.lt.s32.totalorder %s15, 1
        %s282 = scalar_select %p281, %s15, 1
        %s283 = smul.addr %s282, 7
        %s284 = smul.addr %s283, 4
        %s285 = scalar_lea.vmem %s0, %s284
      $region52: #{decoder_rnn_forward.1} parent=47 // pred_fallthru
        _
    $region48: #{decoder_rnn_forward.1} parent=5 // pred_fallthru
      _
    %p286 = scmp.le.s32.totalorder 1, %s15
    %p287 = scmp.lt.s32.totalorder %s15, 3
    %p288 = pnand %p286, %p287
    %p289 = pneg %p288
    // Predicated region
    $region53: #{decoder_rnn_forward.1} parent=5 // pred_check
      _
    $region54: #{decoder_rnn_forward.1} parent=5 // pred_check_branch
      %291 = sbr.rel (%p288) target = $region56
    $region55: #{decoder_rnn_forward.1} parent=5 // pred_region
      %s292 = ssub.s32 %s15, 1
      %p293 = scmp.lt.s32.totalorder %s20, 1
      %s294 = scalar_select %p293, %s20, 1
      %s295 = smul.addr %s294, 7
      %s296 = smul.addr %s295, 4
      %s297 = scalar_lea.vmem %s0, %s296
      %p298 = pneg %p41
      %p299 = pneg %p38
      %p300 = pneg %p62
      %p301 = pneg %p59
      %p302 = pneg %p83
      %p303 = pneg %p80
      %p304 = pneg %p104
      %p305 = pneg %p101
      %p306 = pneg %p125
      %p307 = pneg %p122
      %p308 = pneg %p146
      %p309 = pneg %p143
      %p310 = pneg %p167
      %p311 = pneg %p164
      %p312 = pneg %p188
      %p313 = pneg %p185
      %p314 = pneg %p209
      %p315 = pneg %p206
      %p316 = pneg %p235
      %p317 = pneg %p232
      %p318 = scmp.lt.s32.totalorder %s20, 1
      %s319 = scalar_select %p318, %s20, 1
      %s320 = smul.addr %s319, 7
      %s321 = smul.addr %s320, 8
      %s322 = scalar_lea.vmem %s9, %s321
      %p323 = scmp.lt.s32.totalorder %s20, 1
      %s324 = scalar_select %p323, %s20, 1
      %s325 = smul.addr %s324, 7
      %s326 = smul.addr %s325, 4
      %s327 = scalar_lea.vmem %s0, %s326
      %p328 = scmp.lt.s32.totalorder %s20, 1
      %s329 = scalar_select %p328, %s20, 1
      %s330 = smul.addr %s329, 7
      %s331 = smul.addr %s330, 8
      %s332 = scalar_lea.vmem %s9, %s331
      %v334 = vlaneseq
      %v335 = vand.u32 %v334, 127
      %vm336 = vcmp.ge.s32.totalorder %v335, 64
      %vm337 = vcmp.lt.s32.totalorder %v335, 96
      %vm338 = vmand %vm336, %vm337
      %v339 = vld [vmem:[%s1] sm:$0xf]
      %v340 = vld [vmem:[%s1 + $0x4] sm:$0xf]
      %v341 = vld [vmem:[%s1 + $0x8] sm:$0xf]
      %v342 = vld [vmem:[%s1 + $0xc] sm:$0xf]
      %v343 = vld [vmem:[%s2] sm:$0xf]
      %v344 = vld [vmem:[%s2 + $0x4] sm:$0xf]
      %v345 = vld [vmem:[%s2 + $0x8] sm:$0xf]
      %v346 = vld [vmem:[%s2 + $0xc] sm:$0xf]
      %v347 = vld [vmem:[%s3] sm:$0x1]
      %v348 = vld [vmem:[%s327] sm:$0xf]
      %v349 = vld [vmem:[%s327 + $0x4] sm:$0xf]
      %v350 = vld [vmem:[%s327 + $0x8] sm:$0xf]
      %v351 = vld [vmem:[%s327 + $0xc] sm:$0xf]
      %v352 = vld [vmem:[%s327 + $0x10] sm:$0xf]
      %v353 = vld [vmem:[%s327 + $0x14] sm:$0xf]
      %v354 = vld [vmem:[%s327 + $0x18] sm:$0xf]
      %v356 = vlaneseq
      %v357 = vshrl.u32 %v356, 7
      %v358 = vsub.s32 0, %v357
      %v359 = vrot.slane %v347, %v358
      %v368 = vunpack.c.l.b16 %v348
      %v369 = vunpack.c.l.b16 %v349
      %v370 = vunpack.c.l.b16 %v350
      %v371 = vunpack.c.l.b16 %v351
      %v372 = vunpack.c.l.b16 %v352
      %v373 = vunpack.c.l.b16 %v353
      %v374 = vunpack.c.l.b16 %v354
      %v375 = vpack.c.b16 %v369, %v368
      %v376 = vpack.c.b16 %v371, %v370
      %v377 = vpack.c.b16 %v373, %v372
      %v378 = vpack.c.b16 %v374, %v374
      %v383 = vunpack.c.l.b16 %v339
      %v384 = vunpack.c.l.b16 %v340
      %v385 = vunpack.c.l.b16 %v341
      %v386 = vunpack.c.l.b16 %v342
      %v387 = vpack.c.b16 %v384, %v383
      %v388 = vpack.c.b16 %v386, %v385
      %vm391 = vcmask 261120
      %v393 = vsel %vm391, %v375, 0
      %v396 = vsel %vm391, %v376, 0
      %v399 = vsel %vm391, %v377, 0
      %v402 = vsel %vm391, %v378, 0
      %404 = vmatprep.subr.bf16.mxu0 0
      %405 = vmatpush1.bf16.msra.mxu0 0
      %406 = vmatprep.subr.bf16.mxu0 0
      %407 = vmatpush1.bf16.msra.mxu0 0
      %408 = vmatprep.subr.bf16.mxu0 0
      %409 = vmatpush1.bf16.msra.mxu0 0
      %410 = vmatprep.subr.bf16.mxu0 0
      %411 = vmatpush1.bf16.msra.mxu0 0
      %412 = vmatprep.subr.bf16.mxu0 0
      %413 = vmatpush1.bf16.msra.mxu0 0
      %414 = vmatprep.subr.bf16.mxu0 0
      %415 = vmatpush1.bf16.msra.mxu0 0
      %416 = vmatprep.subr.bf16.mxu0 0
      %417 = vmatpush1.bf16.msra.mxu0 %v388
      %418 = vmatprep.subr.bf16.mxu0 0
      %419 = vmatpush1.bf16.msra.mxu0 %v387
      %420 = vmatprep.subr.bf16.mxu0 0
      %421 = vmatpush2.bf16.msra.mxu0 0
      %422 = vmatprep.subr.bf16.mxu0 0
      %423 = vmatpush2.bf16.msra.mxu0 0
      %424 = vmatprep.subr.bf16.mxu0 0
      %425 = vmatpush2.bf16.msra.mxu0 0
      %426 = vmatprep.subr.bf16.mxu0 0
      %427 = vmatpush2.bf16.msra.mxu0 0
      %428 = vmatprep.subr.bf16.mxu0 0
      %429 = vmatpush2.bf16.msra.mxu0 0
      %430 = vmatprep.subr.bf16.mxu0 0
      %431 = vmatpush2.bf16.msra.mxu0 0
      %432 = vmatprep.subr.bf16.mxu0 0
      %433 = vmatpush2.bf16.msra.mxu0 0
      %434 = vmatprep.subr.bf16.mxu0 0
      %435 = vmatpush2.bf16.msra.mxu0 0
      %436 = vmatprep.mubr.bf16.mxu0 0
      %437 = vmatmul.mubr.bf16.gmra.mxu0 %v393
      %v438 = vpop.f32.mrf.mxu0
      %v439 = vadd.f32 %v359, %v438
      %v440 = vpop.f32.mrf.mxu0
      %v441 = vpop.f32.mrf.mxu0
      %v442 = vadd.f32 %v359, %v441
      %v443 = vpop.f32.mrf.mxu0
      %444 = vmatprep.mubr.bf16.mxu0 0
      %445 = vmatmul.mubr.bf16.gmra.mxu0 %v396
      %v446 = vpop.f32.mrf.mxu0
      %v447 = vadd.f32 %v359, %v446
      %v448 = vpop.f32.mrf.mxu0
      %v449 = vpop.f32.mrf.mxu0
      %v450 = vadd.f32 %v359, %v449
      %v451 = vpop.f32.mrf.mxu0
      %452 = vmatprep.mubr.bf16.mxu0 0
      %453 = vmatmul.mubr.bf16.gmra.mxu0 %v399
      %v454 = vpop.f32.mrf.mxu0
      %v455 = vadd.f32 %v359, %v454
      %v456 = vpop.f32.mrf.mxu0
      %v457 = vpop.f32.mrf.mxu0
      %v458 = vadd.f32 %v359, %v457
      %v459 = vpop.f32.mrf.mxu0
      %460 = vmatprep.mubr.bf16.mxu0 0
      %461 = vmatmul.mubr.bf16.gmra.mxu0 %v402
      %v462 = vpop.f32.mrf.mxu0
      %v463 = vadd.f32 %v359, %v462
      %v464 = vpop.f32.mrf.mxu0
      %v465 = vpop.f32.mrf.mxu0
      %v466 = vpop.f32.mrf.mxu0
      %467 = vdwg.mxu0
      %468 = vst [vmem:[#allocation2] sm:$0xff] %v439
      %469 = vst [vmem:[#allocation2 + $0x8] sm:$0xff] %v442
      %470 = vst [vmem:[#allocation2 + $0x10] sm:$0xff] %v447
      %471 = vst [vmem:[#allocation2 + $0x18] sm:$0xff] %v450
      %472 = vst [vmem:[#allocation2 + $0x20] sm:$0xff] %v455
      %473 = vst [vmem:[#allocation2 + $0x28] sm:$0xff] %v458
      %474 = vst [vmem:[#allocation2 + $0x30] sm:$0xff] %v463
      %v475 = vld [vmem:[#allocation2] sm:$0xff]
      %v480 = vunpack.c.l.b16 %v343
      %v481 = vunpack.c.l.b16 %v344
      %v482 = vunpack.c.l.b16 %v345
      %v483 = vunpack.c.l.b16 %v346
      %v484 = vpack.c.b16 %v481, %v480
      %v485 = vpack.c.b16 %v483, %v482
      %v489 = vsel %vm391, 0, 0
      %491 = vmatprep.subr.bf16.mxu0 0
      %492 = vmatpush1.bf16.msra.mxu0 0
      %493 = vmatprep.subr.bf16.mxu0 0
      %494 = vmatpush1.bf16.msra.mxu0 0
      %495 = vmatprep.subr.bf16.mxu0 0
      %496 = vmatpush1.bf16.msra.mxu0 0
      %497 = vmatprep.subr.bf16.mxu0 0
      %498 = vmatpush1.bf16.msra.mxu0 0
      %499 = vmatprep.subr.bf16.mxu0 0
      %500 = vmatpush1.bf16.msra.mxu0 0
      %501 = vmatprep.subr.bf16.mxu0 0
      %502 = vmatpush1.bf16.msra.mxu0 0
      %503 = vmatprep.subr.bf16.mxu0 0
      %504 = vmatpush1.bf16.msra.mxu0 %v485
      %505 = vmatprep.subr.bf16.mxu0 0
      %506 = vmatpush1.bf16.msra.mxu0 %v484
      %507 = vmatprep.subr.bf16.mxu0 0
      %508 = vmatpush2.bf16.msra.mxu0 0
      %509 = vmatprep.subr.bf16.mxu0 0
      %510 = vmatpush2.bf16.msra.mxu0 0
      %511 = vmatprep.subr.bf16.mxu0 0
      %512 = vmatpush2.bf16.msra.mxu0 0
      %513 = vmatprep.subr.bf16.mxu0 0
      %514 = vmatpush2.bf16.msra.mxu0 0
      %515 = vmatprep.subr.bf16.mxu0 0
      %516 = vmatpush2.bf16.msra.mxu0 0
      %517 = vmatprep.subr.bf16.mxu0 0
      %518 = vmatpush2.bf16.msra.mxu0 0
      %519 = vmatprep.subr.bf16.mxu0 0
      %520 = vmatpush2.bf16.msra.mxu0 0
      %521 = vmatprep.subr.bf16.mxu0 0
      %522 = vmatpush2.bf16.msra.mxu0 0
      %523 = vmatprep.mubr.bf16.mxu0 0
      %524 = vmatmul.mubr.bf16.gmra.mxu0 %v489
      %v525 = vpop.f32.mrf.mxu0
      %v526 = vadd.f32 0.0, %v525
      %v527 = vpop.f32.mrf.mxu0
      %v528 = vpop.f32.mrf.mxu0
      %v529 = vpop.f32.mrf.mxu0
      %530 = vdwg.mxu0
      %v531 = vadd.f32 %v475, %v526
      %v532 = vmul.f32 %v531, 2.0
      %v533 = vsel %vm338, %v532, %v531
      %v534 = vxor.u32 %v533, 2147483648
      %v535 = vmul.f32 %v534, 1.442695
      %v536 = vpow.pop %v535
      %v537 = vadd.f32 %v536, 1.0
      %v538 = vrcp.pop %v537
      %v539 = vmul.f32 1.0, %v538
      %v540 = vmul.f32 %v539, 2.0
      %v541 = vsub.f32 %v540, 1.0
      %v542 = vsel %vm338, %v541, %v539
      %v543 = vmul.f32 %v542, 0.0
      %545 = vrot.lane.b32.xlu0 %v542, 64
      %v546 = vpop.permute.xlu0 %545
      %v548 = vmul.f32 %v542, %v546
      %550 = vrot.lane.b32.xlu0 %v548, 32
      %v551 = vpop.permute.xlu0 %550
      %v553 = vadd.f32 %v543, %v551
      %v554 = vtanh.pop %v553
      %556 = vrot.lane.b32.xlu0 %v554, 64
      %v557 = vpop.permute.xlu0 %556
      %v559 = vmul.f32 %v542, %v557
      %v560 = vpack.c.bf16 %v559, %v559
      %v562 = vunpack.c.l.b16 %v560
      %v563 = vpack.c.b16 %v562, %v562
      %564 = vrot.lane.b32.xlu0 %v563, 32
      %v565 = vpop.permute.xlu0 %564
      %vm567 = vcmask 257024
      %568 = vst.msk [vmem:[#allocation3] sm:$0xf] %vm567, %v565
      %s569 = scalar_lea.vmem [#allocation2], 8
      %v570 = vld [vmem:[%s569] sm:$0xff]
      %571 = vrot.lane.b32.xlu0 %v560, 32
      %v572 = vpop.permute.xlu0 %571
      %v574 = vsel %vm391, %v572, 0
      %576 = vmatprep.subr.bf16.mxu0 0
      %577 = vmatpush1.bf16.msra.mxu0 0
      %578 = vmatprep.subr.bf16.mxu0 0
      %579 = vmatpush1.bf16.msra.mxu0 0
      %580 = vmatprep.subr.bf16.mxu0 0
      %581 = vmatpush1.bf16.msra.mxu0 0
      %582 = vmatprep.subr.bf16.mxu0 0
      %583 = vmatpush1.bf16.msra.mxu0 0
      %584 = vmatprep.subr.bf16.mxu0 0
      %585 = vmatpush1.bf16.msra.mxu0 0
      %586 = vmatprep.subr.bf16.mxu0 0
      %587 = vmatpush1.bf16.msra.mxu0 0
      %588 = vmatprep.subr.bf16.mxu0 0
      %589 = vmatpush1.bf16.msra.mxu0 %v485
      %590 = vmatprep.subr.bf16.mxu0 0
      %591 = vmatpush1.bf16.msra.mxu0 %v484
      %592 = vmatprep.subr.bf16.mxu0 0
      %593 = vmatpush2.bf16.msra.mxu0 0
      %594 = vmatprep.subr.bf16.mxu0 0
      %595 = vmatpush2.bf16.msra.mxu0 0
      %596 = vmatprep.subr.bf16.mxu0 0
      %597 = vmatpush2.bf16.msra.mxu0 0
      %598 = vmatprep.subr.bf16.mxu0 0
      %599 = vmatpush2.bf16.msra.mxu0 0
      %600 = vmatprep.subr.bf16.mxu0 0
      %601 = vmatpush2.bf16.msra.mxu0 0
      %602 = vmatprep.subr.bf16.mxu0 0
      %603 = vmatpush2.bf16.msra.mxu0 0
      %604 = vmatprep.subr.bf16.mxu0 0
      %605 = vmatpush2.bf16.msra.mxu0 0
      %606 = vmatprep.subr.bf16.mxu0 0
      %607 = vmatpush2.bf16.msra.mxu0 0
      %608 = vmatprep.mubr.bf16.mxu0 0
      %609 = vmatmul.mubr.bf16.gmra.mxu0 %v574
      %v610 = vpop.f32.mrf.mxu0
      %v611 = vadd.f32 0.0, %v610
      %v612 = vpop.f32.mrf.mxu0
      %v613 = vpop.f32.mrf.mxu0
      %v614 = vpop.f32.mrf.mxu0
      %615 = vdwg.mxu0
      %v616 = vadd.f32 %v570, %v611
      %v617 = vmul.f32 %v616, 2.0
      %v618 = vsel %vm338, %v617, %v616
      %v619 = vxor.u32 %v618, 2147483648
      %v620 = vmul.f32 %v619, 1.442695
      %v621 = vpow.pop %v620
      %v622 = vadd.f32 %v621, 1.0
      %v623 = vrcp.pop %v622
      %v624 = vmul.f32 1.0, %v623
      %v625 = vmul.f32 %v624, 2.0
      %v626 = vsub.f32 %v625, 1.0
      %v627 = vsel %vm338, %v626, %v624
      %v628 = vmul.f32 %v627, %v553
      %630 = vrot.lane.b32.xlu0 %v627, 64
      %v631 = vpop.permute.xlu0 %630
      %v633 = vmul.f32 %v627, %v631
      %635 = vrot.lane.b32.xlu0 %v633, 32
      %v636 = vpop.permute.xlu0 %635
      %v638 = vadd.f32 %v628, %v636
      %v639 = vtanh.pop %v638
      %641 = vrot.lane.b32.xlu0 %v639, 64
      %v642 = vpop.permute.xlu0 %641
      %v644 = vmul.f32 %v627, %v642
      %v645 = vpack.c.bf16 %v644, %v644
      %v647 = vunpack.c.l.b16 %v645
      %v648 = vpack.c.b16 %v647, %v647
      %649 = vrot.lane.b32.xlu0 %v648, 32
      %v650 = vpop.permute.xlu0 %649
      %s652 = scalar_lea.vmem [#allocation3], 4
      %653 = vst.msk [vmem:[%s652] sm:$0xf] %vm567, %v650
      %s654 = scalar_lea.vmem [#allocation2], 16
      %v655 = vld [vmem:[%s654] sm:$0xff]
      %656 = vrot.lane.b32.xlu0 %v645, 32
      %v657 = vpop.permute.xlu0 %656
      %v659 = vsel %vm391, %v657, 0
      %661 = vmatprep.subr.bf16.mxu0 0
      %662 = vmatpush1.bf16.msra.mxu0 0
      %663 = vmatprep.subr.bf16.mxu0 0
      %664 = vmatpush1.bf16.msra.mxu0 0
      %665 = vmatprep.subr.bf16.mxu0 0
      %666 = vmatpush1.bf16.msra.mxu0 0
      %667 = vmatprep.subr.bf16.mxu0 0
      %668 = vmatpush1.bf16.msra.mxu0 0
      %669 = vmatprep.subr.bf16.mxu0 0
      %670 = vmatpush1.bf16.msra.mxu0 0
      %671 = vmatprep.subr.bf16.mxu0 0
      %672 = vmatpush1.bf16.msra.mxu0 0
      %673 = vmatprep.subr.bf16.mxu0 0
      %674 = vmatpush1.bf16.msra.mxu0 %v485
      %675 = vmatprep.subr.bf16.mxu0 0
      %676 = vmatpush1.bf16.msra.mxu0 %v484
      %677 = vmatprep.subr.bf16.mxu0 0
      %678 = vmatpush2.bf16.msra.mxu0 0
      %679 = vmatprep.subr.bf16.mxu0 0
      %680 = vmatpush2.bf16.msra.mxu0 0
      %681 = vmatprep.subr.bf16.mxu0 0
      %682 = vmatpush2.bf16.msra.mxu0 0
      %683 = vmatprep.subr.bf16.mxu0 0
      %684 = vmatpush2.bf16.msra.mxu0 0
      %685 = vmatprep.subr.bf16.mxu0 0
      %686 = vmatpush2.bf16.msra.mxu0 0
      %687 = vmatprep.subr.bf16.mxu0 0
      %688 = vmatpush2.bf16.msra.mxu0 0
      %689 = vmatprep.subr.bf16.mxu0 0
      %690 = vmatpush2.bf16.msra.mxu0 0
      %691 = vmatprep.subr.bf16.mxu0 0
      %692 = vmatpush2.bf16.msra.mxu0 0
      %693 = vmatprep.mubr.bf16.mxu0 0
      %694 = vmatmul.mubr.bf16.gmra.mxu0 %v659
      %v695 = vpop.f32.mrf.mxu0
      %v696 = vadd.f32 0.0, %v695
      %v697 = vpop.f32.mrf.mxu0
      %v698 = vpop.f32.mrf.mxu0
      %v699 = vpop.f32.mrf.mxu0
      %700 = vdwg.mxu0
      %v701 = vadd.f32 %v655, %v696
      %v702 = vmul.f32 %v701, 2.0
      %v703 = vsel %vm338, %v702, %v701
      %v704 = vxor.u32 %v703, 2147483648
      %v705 = vmul.f32 %v704, 1.442695
      %v706 = vpow.pop %v705
      %v707 = vadd.f32 %v706, 1.0
      %v708 = vrcp.pop %v707
      %v709 = vmul.f32 1.0, %v708
      %v710 = vmul.f32 %v709, 2.0
      %v711 = vsub.f32 %v710, 1.0
      %v712 = vsel %vm338, %v711, %v709
      %v713 = vmul.f32 %v712, %v638
      %715 = vrot.lane.b32.xlu0 %v712, 64
      %v716 = vpop.permute.xlu0 %715
      %v718 = vmul.f32 %v712, %v716
      %720 = vrot.lane.b32.xlu0 %v718, 32
      %v721 = vpop.permute.xlu0 %720
      %v723 = vadd.f32 %v713, %v721
      %v724 = vtanh.pop %v723
      %726 = vrot.lane.b32.xlu0 %v724, 64
      %v727 = vpop.permute.xlu0 %726
      %v729 = vmul.f32 %v712, %v727
      %v730 = vpack.c.bf16 %v729, %v729
      %v732 = vunpack.c.l.b16 %v730
      %v733 = vpack.c.b16 %v732, %v732
      %734 = vrot.lane.b32.xlu0 %v733, 32
      %v735 = vpop.permute.xlu0 %734
      %s737 = scalar_lea.vmem [#allocation3], 8
      %738 = vst.msk [vmem:[%s737] sm:$0xf] %vm567, %v735
      %s739 = scalar_lea.vmem [#allocation2], 24
      %v740 = vld [vmem:[%s739] sm:$0xff]
      %741 = vrot.lane.b32.xlu0 %v730, 32
      %v742 = vpop.permute.xlu0 %741
      %v744 = vsel %vm391, %v742, 0
      %746 = vmatprep.subr.bf16.mxu0 0
      %747 = vmatpush1.bf16.msra.mxu0 0
      %748 = vmatprep.subr.bf16.mxu0 0
      %749 = vmatpush1.bf16.msra.mxu0 0
      %750 = vmatprep.subr.bf16.mxu0 0
      %751 = vmatpush1.bf16.msra.mxu0 0
      %752 = vmatprep.subr.bf16.mxu0 0
      %753 = vmatpush1.bf16.msra.mxu0 0
      %754 = vmatprep.subr.bf16.mxu0 0
      %755 = vmatpush1.bf16.msra.mxu0 0
      %756 = vmatprep.subr.bf16.mxu0 0
      %757 = vmatpush1.bf16.msra.mxu0 0
      %758 = vmatprep.subr.bf16.mxu0 0
      %759 = vmatpush1.bf16.msra.mxu0 %v485
      %760 = vmatprep.subr.bf16.mxu0 0
      %761 = vmatpush1.bf16.msra.mxu0 %v484
      %762 = vmatprep.subr.bf16.mxu0 0
      %763 = vmatpush2.bf16.msra.mxu0 0
      %764 = vmatprep.subr.bf16.mxu0 0
      %765 = vmatpush2.bf16.msra.mxu0 0
      %766 = vmatprep.subr.bf16.mxu0 0
      %767 = vmatpush2.bf16.msra.mxu0 0
      %768 = vmatprep.subr.bf16.mxu0 0
      %769 = vmatpush2.bf16.msra.mxu0 0
      %770 = vmatprep.subr.bf16.mxu0 0
      %771 = vmatpush2.bf16.msra.mxu0 0
      %772 = vmatprep.subr.bf16.mxu0 0
      %773 = vmatpush2.bf16.msra.mxu0 0
      %774 = vmatprep.subr.bf16.mxu0 0
      %775 = vmatpush2.bf16.msra.mxu0 0
      %776 = vmatprep.subr.bf16.mxu0 0
      %777 = vmatpush2.bf16.msra.mxu0 0
      %778 = vmatprep.mubr.bf16.mxu0 0
      %779 = vmatmul.mubr.bf16.gmra.mxu0 %v744
      %v780 = vpop.f32.mrf.mxu0
      %v781 = vadd.f32 0.0, %v780
      %v782 = vpop.f32.mrf.mxu0
      %v783 = vpop.f32.mrf.mxu0
      %v784 = vpop.f32.mrf.mxu0
      %785 = vdwg.mxu0
      %v786 = vadd.f32 %v740, %v781
      %v787 = vmul.f32 %v786, 2.0
      %v788 = vsel %vm338, %v787, %v786
      %v789 = vxor.u32 %v788, 2147483648
      %v790 = vmul.f32 %v789, 1.442695
      %v791 = vpow.pop %v790
      %v792 = vadd.f32 %v791, 1.0
      %v793 = vrcp.pop %v792
      %v794 = vmul.f32 1.0, %v793
      %v795 = vmul.f32 %v794, 2.0
      %v796 = vsub.f32 %v795, 1.0
      %v797 = vsel %vm338, %v796, %v794
      %v798 = vmul.f32 %v797, %v723
      %800 = vrot.lane.b32.xlu0 %v797, 64
      %v801 = vpop.permute.xlu0 %800
      %v803 = vmul.f32 %v797, %v801
      %805 = vrot.lane.b32.xlu0 %v803, 32
      %v806 = vpop.permute.xlu0 %805
      %v808 = vadd.f32 %v798, %v806
      %v809 = vtanh.pop %v808
      %811 = vrot.lane.b32.xlu0 %v809, 64
      %v812 = vpop.permute.xlu0 %811
      %v814 = vmul.f32 %v797, %v812
      %v815 = vpack.c.bf16 %v814, %v814
      %v817 = vunpack.c.l.b16 %v815
      %v818 = vpack.c.b16 %v817, %v817
      %819 = vrot.lane.b32.xlu0 %v818, 32
      %v820 = vpop.permute.xlu0 %819
      %s822 = scalar_lea.vmem [#allocation3], 12
      %823 = vst.msk [vmem:[%s822] sm:$0xf] %vm567, %v820
      %s824 = scalar_lea.vmem [#allocation2], 32
      %v825 = vld [vmem:[%s824] sm:$0xff]
      %826 = vrot.lane.b32.xlu0 %v815, 32
      %v827 = vpop.permute.xlu0 %826
      %v829 = vsel %vm391, %v827, 0
      %831 = vmatprep.subr.bf16.mxu0 0
      %832 = vmatpush1.bf16.msra.mxu0 0
      %833 = vmatprep.subr.bf16.mxu0 0
      %834 = vmatpush1.bf16.msra.mxu0 0
      %835 = vmatprep.subr.bf16.mxu0 0
      %836 = vmatpush1.bf16.msra.mxu0 0
      %837 = vmatprep.subr.bf16.mxu0 0
      %838 = vmatpush1.bf16.msra.mxu0 0
      %839 = vmatprep.subr.bf16.mxu0 0
      %840 = vmatpush1.bf16.msra.mxu0 0
      %841 = vmatprep.subr.bf16.mxu0 0
      %842 = vmatpush1.bf16.msra.mxu0 0
      %843 = vmatprep.subr.bf16.mxu0 0
      %844 = vmatpush1.bf16.msra.mxu0 %v485
      %845 = vmatprep.subr.bf16.mxu0 0
      %846 = vmatpush1.bf16.msra.mxu0 %v484
      %847 = vmatprep.subr.bf16.mxu0 0
      %848 = vmatpush2.bf16.msra.mxu0 0
      %849 = vmatprep.subr.bf16.mxu0 0
      %850 = vmatpush2.bf16.msra.mxu0 0
      %851 = vmatprep.subr.bf16.mxu0 0
      %852 = vmatpush2.bf16.msra.mxu0 0
      %853 = vmatprep.subr.bf16.mxu0 0
      %854 = vmatpush2.bf16.msra.mxu0 0
      %855 = vmatprep.subr.bf16.mxu0 0
      %856 = vmatpush2.bf16.msra.mxu0 0
      %857 = vmatprep.subr.bf16.mxu0 0
      %858 = vmatpush2.bf16.msra.mxu0 0
      %859 = vmatprep.subr.bf16.mxu0 0
      %860 = vmatpush2.bf16.msra.mxu0 0
      %861 = vmatprep.subr.bf16.mxu0 0
      %862 = vmatpush2.bf16.msra.mxu0 0
      %863 = vmatprep.mubr.bf16.mxu0 0
      %864 = vmatmul.mubr.bf16.gmra.mxu0 %v829
      %v865 = vpop.f32.mrf.mxu0
      %v866 = vadd.f32 0.0, %v865
      %v867 = vpop.f32.mrf.mxu0
      %v868 = vpop.f32.mrf.mxu0
      %v869 = vpop.f32.mrf.mxu0
      %870 = vdwg.mxu0
      %v871 = vadd.f32 %v825, %v866
      %v872 = vmul.f32 %v871, 2.0
      %v873 = vsel %vm338, %v872, %v871
      %v874 = vxor.u32 %v873, 2147483648
      %v875 = vmul.f32 %v874, 1.442695
      %v876 = vpow.pop %v875
      %v877 = vadd.f32 %v876, 1.0
      %v878 = vrcp.pop %v877
      %v879 = vmul.f32 1.0, %v878
      %v880 = vmul.f32 %v879, 2.0
      %v881 = vsub.f32 %v880, 1.0
      %v882 = vsel %vm338, %v881, %v879
      %v883 = vmul.f32 %v882, %v808
      %885 = vrot.lane.b32.xlu0 %v882, 64
      %v886 = vpop.permute.xlu0 %885
      %v888 = vmul.f32 %v882, %v886
      %890 = vrot.lane.b32.xlu0 %v888, 32
      %v891 = vpop.permute.xlu0 %890
      %v893 = vadd.f32 %v883, %v891
      %v894 = vtanh.pop %v893
      %896 = vrot.lane.b32.xlu0 %v894, 64
      %v897 = vpop.permute.xlu0 %896
      %v899 = vmul.f32 %v882, %v897
      %v900 = vpack.c.bf16 %v899, %v899
      %v902 = vunpack.c.l.b16 %v900
      %v903 = vpack.c.b16 %v902, %v902
      %904 = vrot.lane.b32.xlu0 %v903, 32
      %v905 = vpop.permute.xlu0 %904
      %s907 = scalar_lea.vmem [#allocation3], 16
      %908 = vst.msk [vmem:[%s907] sm:$0xf] %vm567, %v905
      %s909 = scalar_lea.vmem [#allocation2], 40
      %v910 = vld [vmem:[%s909] sm:$0xff]
      %911 = vrot.lane.b32.xlu0 %v900, 32
      %v912 = vpop.permute.xlu0 %911
      %v914 = vsel %vm391, %v912, 0
      %916 = vmatprep.subr.bf16.mxu0 0
      %917 = vmatpush1.bf16.msra.mxu0 0
      %918 = vmatprep.subr.bf16.mxu0 0
      %919 = vmatpush1.bf16.msra.mxu0 0
      %920 = vmatprep.subr.bf16.mxu0 0
      %921 = vmatpush1.bf16.msra.mxu0 0
      %922 = vmatprep.subr.bf16.mxu0 0
      %923 = vmatpush1.bf16.msra.mxu0 0
      %924 = vmatprep.subr.bf16.mxu0 0
      %925 = vmatpush1.bf16.msra.mxu0 0
      %926 = vmatprep.subr.bf16.mxu0 0
      %927 = vmatpush1.bf16.msra.mxu0 0
      %928 = vmatprep.subr.bf16.mxu0 0
      %929 = vmatpush1.bf16.msra.mxu0 %v485
      %930 = vmatprep.subr.bf16.mxu0 0
      %931 = vmatpush1.bf16.msra.mxu0 %v484
      %932 = vmatprep.subr.bf16.mxu0 0
      %933 = vmatpush2.bf16.msra.mxu0 0
      %934 = vmatprep.subr.bf16.mxu0 0
      %935 = vmatpush2.bf16.msra.mxu0 0
      %936 = vmatprep.subr.bf16.mxu0 0
      %937 = vmatpush2.bf16.msra.mxu0 0
      %938 = vmatprep.subr.bf16.mxu0 0
      %939 = vmatpush2.bf16.msra.mxu0 0
      %940 = vmatprep.subr.bf16.mxu0 0
      %941 = vmatpush2.bf16.msra.mxu0 0
      %942 = vmatprep.subr.bf16.mxu0 0
      %943 = vmatpush2.bf16.msra.mxu0 0
      %944 = vmatprep.subr.bf16.mxu0 0
      %945 = vmatpush2.bf16.msra.mxu0 0
      %946 = vmatprep.subr.bf16.mxu0 0
      %947 = vmatpush2.bf16.msra.mxu0 0
      %948 = vmatprep.mubr.bf16.mxu0 0
      %949 = vmatmul.mubr.bf16.gmra.mxu0 %v914
      %v950 = vpop.f32.mrf.mxu0
      %v951 = vadd.f32 0.0, %v950
      %v952 = vpop.f32.mrf.mxu0
      %v953 = vpop.f32.mrf.mxu0
      %v954 = vpop.f32.mrf.mxu0
      %955 = vdwg.mxu0
      %v956 = vadd.f32 %v910, %v951
      %v957 = vmul.f32 %v956, 2.0
      %v958 = vsel %vm338, %v957, %v956
      %v959 = vxor.u32 %v958, 2147483648
      %v960 = vmul.f32 %v959, 1.442695
      %v961 = vpow.pop %v960
      %v962 = vadd.f32 %v961, 1.0
      %v963 = vrcp.pop %v962
      %v964 = vmul.f32 1.0, %v963
      %v965 = vmul.f32 %v964, 2.0
      %v966 = vsub.f32 %v965, 1.0
      %v967 = vsel %vm338, %v966, %v964
      %v968 = vmul.f32 %v967, %v893
      %970 = vrot.lane.b32.xlu0 %v967, 64
      %v971 = vpop.permute.xlu0 %970
      %v973 = vmul.f32 %v967, %v971
      %975 = vrot.lane.b32.xlu0 %v973, 32
      %v976 = vpop.permute.xlu0 %975
      %v978 = vadd.f32 %v968, %v976
      %v979 = vtanh.pop %v978
      %981 = vrot.lane.b32.xlu0 %v979, 64
      %v982 = vpop.permute.xlu0 %981
      %v984 = vmul.f32 %v967, %v982
      %v985 = vpack.c.bf16 %v984, %v984
      %v987 = vunpack.c.l.b16 %v985
      %v988 = vpack.c.b16 %v987, %v987
      %989 = vrot.lane.b32.xlu0 %v988, 32
      %v990 = vpop.permute.xlu0 %989
      %s992 = scalar_lea.vmem [#allocation3], 20
      %993 = vst.msk [vmem:[%s992] sm:$0xf] %vm567, %v990
      %s994 = scalar_lea.vmem [#allocation2], 48
      %v995 = vld [vmem:[%s994] sm:$0xff]
      %996 = vrot.lane.b32.xlu0 %v985, 32
      %v997 = vpop.permute.xlu0 %996
      %v999 = vsel %vm391, %v997, 0
      %1001 = vmatprep.subr.bf16.mxu0 0
      %1002 = vmatpush1.bf16.msra.mxu0 0
      %1003 = vmatprep.subr.bf16.mxu0 0
      %1004 = vmatpush1.bf16.msra.mxu0 0
      %1005 = vmatprep.subr.bf16.mxu0 0
      %1006 = vmatpush1.bf16.msra.mxu0 0
      %1007 = vmatprep.subr.bf16.mxu0 0
      %1008 = vmatpush1.bf16.msra.mxu0 0
      %1009 = vmatprep.subr.bf16.mxu0 0
      %1010 = vmatpush1.bf16.msra.mxu0 0
      %1011 = vmatprep.subr.bf16.mxu0 0
      %1012 = vmatpush1.bf16.msra.mxu0 0
      %1013 = vmatprep.subr.bf16.mxu0 0
      %1014 = vmatpush1.bf16.msra.mxu0 %v485
      %1015 = vmatprep.subr.bf16.mxu0 0
      %1016 = vmatpush1.bf16.msra.mxu0 %v484
      %1017 = vmatprep.subr.bf16.mxu0 0
      %1018 = vmatpush2.bf16.msra.mxu0 0
      %1019 = vmatprep.subr.bf16.mxu0 0
      %1020 = vmatpush2.bf16.msra.mxu0 0
      %1021 = vmatprep.subr.bf16.mxu0 0
      %1022 = vmatpush2.bf16.msra.mxu0 0
      %1023 = vmatprep.subr.bf16.mxu0 0
      %1024 = vmatpush2.bf16.msra.mxu0 0
      %1025 = vmatprep.subr.bf16.mxu0 0
      %1026 = vmatpush2.bf16.msra.mxu0 0
      %1027 = vmatprep.subr.bf16.mxu0 0
      %1028 = vmatpush2.bf16.msra.mxu0 0
      %1029 = vmatprep.subr.bf16.mxu0 0
      %1030 = vmatpush2.bf16.msra.mxu0 0
      %1031 = vmatprep.subr.bf16.mxu0 0
      %1032 = vmatpush2.bf16.msra.mxu0 0
      %1033 = vmatprep.mubr.bf16.mxu0 0
      %1034 = vmatmul.mubr.bf16.gmra.mxu0 %v999
      %v1035 = vpop.f32.mrf.mxu0
      %v1036 = vadd.f32 0.0, %v1035
      %v1037 = vpop.f32.mrf.mxu0
      %v1038 = vpop.f32.mrf.mxu0
      %v1039 = vpop.f32.mrf.mxu0
      %1040 = vdwg.mxu0
      %v1041 = vadd.f32 %v995, %v1036
      %v1042 = vmul.f32 %v1041, 2.0
      %v1043 = vsel %vm338, %v1042, %v1041
      %v1044 = vxor.u32 %v1043, 2147483648
      %v1045 = vmul.f32 %v1044, 1.442695
      %v1046 = vpow.pop %v1045
      %v1047 = vadd.f32 %v1046, 1.0
      %v1048 = vrcp.pop %v1047
      %v1049 = vmul.f32 1.0, %v1048
      %v1050 = vmul.f32 %v1049, 2.0
      %v1051 = vsub.f32 %v1050, 1.0
      %v1052 = vsel %vm338, %v1051, %v1049
      %v1053 = vmul.f32 %v1052, %v978
      %1055 = vrot.lane.b32.xlu0 %v1052, 64
      %v1056 = vpop.permute.xlu0 %1055
      %v1058 = vmul.f32 %v1052, %v1056
      %1060 = vrot.lane.b32.xlu0 %v1058, 32
      %v1061 = vpop.permute.xlu0 %1060
      %v1063 = vadd.f32 %v1053, %v1061
      %v1064 = vtanh.pop %v1063
      %1066 = vrot.lane.b32.xlu0 %v1064, 64
      %v1067 = vpop.permute.xlu0 %1066
      %v1069 = vmul.f32 %v1052, %v1067
      %v1070 = vpack.c.bf16 %v1069, %v1069
      %v1072 = vunpack.c.l.b16 %v1070
      %v1073 = vpack.c.b16 %v1072, %v1072
      %1074 = vrot.lane.b32.xlu0 %v1073, 32
      %v1075 = vpop.permute.xlu0 %1074
      %s1077 = scalar_lea.vmem [#allocation3], 24
      %1078 = vst.msk [vmem:[%s1077] sm:$0xf] %vm567, %v1075
      %v1079 = vld [vmem:[%s4] sm:$0xf]
      %v1080 = vld [vmem:[%s4 + $0x4] sm:$0xf]
      %v1081 = vld [vmem:[%s4 + $0x8] sm:$0xf]
      %v1082 = vld [vmem:[%s4 + $0xc] sm:$0xf]
      %v1083 = vld [vmem:[%s5] sm:$0xf]
      %v1084 = vld [vmem:[%s5 + $0x4] sm:$0xf]
      %v1085 = vld [vmem:[%s5 + $0x8] sm:$0xf]
      %v1086 = vld [vmem:[%s5 + $0xc] sm:$0xf]
      %v1087 = vld [vmem:[%s6] sm:$0x1]
      %v1088 = vld [vmem:[#allocation3] sm:$0xf]
      %v1089 = vld [vmem:[#allocation3 + $0x4] sm:$0xf]
      %v1090 = vld [vmem:[#allocation3 + $0x8] sm:$0xf]
      %v1091 = vld [vmem:[#allocation3 + $0xc] sm:$0xf]
      %v1092 = vld [vmem:[#allocation3 + $0x10] sm:$0xf]
      %v1093 = vld [vmem:[#allocation3 + $0x14] sm:$0xf]
      %v1094 = vld [vmem:[#allocation3 + $0x18] sm:$0xf]
      %v1096 = vlaneseq
      %v1097 = vshrl.u32 %v1096, 7
      %v1098 = vsub.s32 0, %v1097
      %v1099 = vrot.slane %v1087, %v1098
      %v1108 = vunpack.c.l.b16 %v1088
      %v1109 = vunpack.c.l.b16 %v1089
      %v1110 = vunpack.c.l.b16 %v1090
      %v1111 = vunpack.c.l.b16 %v1091
      %v1112 = vunpack.c.l.b16 %v1092
      %v1113 = vunpack.c.l.b16 %v1093
      %v1114 = vunpack.c.l.b16 %v1094
      %v1115 = vpack.c.b16 %v1109, %v1108
      %v1116 = vpack.c.b16 %v1111, %v1110
      %v1117 = vpack.c.b16 %v1113, %v1112
      %v1118 = vpack.c.b16 %v1114, %v1114
      %v1123 = vunpack.c.l.b16 %v1079
      %v1124 = vunpack.c.l.b16 %v1080
      %v1125 = vunpack.c.l.b16 %v1081
      %v1126 = vunpack.c.l.b16 %v1082
      %v1127 = vpack.c.b16 %v1124, %v1123
      %v1128 = vpack.c.b16 %v1126, %v1125
      %v1132 = vsel %vm391, %v1115, 0
      %v1135 = vsel %vm391, %v1116, 0
      %v1138 = vsel %vm391, %v1117, 0
      %v1141 = vsel %vm391, %v1118, 0
      %1143 = vmatprep.subr.bf16.mxu0 0
      %1144 = vmatpush1.bf16.msra.mxu0 0
      %1145 = vmatprep.subr.bf16.mxu0 0
      %1146 = vmatpush1.bf16.msra.mxu0 0
      %1147 = vmatprep.subr.bf16.mxu0 0
      %1148 = vmatpush1.bf16.msra.mxu0 0
      %1149 = vmatprep.subr.bf16.mxu0 0
      %1150 = vmatpush1.bf16.msra.mxu0 0
      %1151 = vmatprep.subr.bf16.mxu0 0
      %1152 = vmatpush1.bf16.msra.mxu0 0
      %1153 = vmatprep.subr.bf16.mxu0 0
      %1154 = vmatpush1.bf16.msra.mxu0 0
      %1155 = vmatprep.subr.bf16.mxu0 0
      %1156 = vmatpush1.bf16.msra.mxu0 %v1128
      %1157 = vmatprep.subr.bf16.mxu0 0
      %1158 = vmatpush1.bf16.msra.mxu0 %v1127
      %1159 = vmatprep.subr.bf16.mxu0 0
      %1160 = vmatpush2.bf16.msra.mxu0 0
      %1161 = vmatprep.subr.bf16.mxu0 0
      %1162 = vmatpush2.bf16.msra.mxu0 0
      %1163 = vmatprep.subr.bf16.mxu0 0
      %1164 = vmatpush2.bf16.msra.mxu0 0
      %1165 = vmatprep.subr.bf16.mxu0 0
      %1166 = vmatpush2.bf16.msra.mxu0 0
      %1167 = vmatprep.subr.bf16.mxu0 0
      %1168 = vmatpush2.bf16.msra.mxu0 0
      %1169 = vmatprep.subr.bf16.mxu0 0
      %1170 = vmatpush2.bf16.msra.mxu0 0
      %1171 = vmatprep.subr.bf16.mxu0 0
      %1172 = vmatpush2.bf16.msra.mxu0 0
      %1173 = vmatprep.subr.bf16.mxu0 0
      %1174 = vmatpush2.bf16.msra.mxu0 0
      %1175 = vmatprep.mubr.bf16.mxu0 0
      %1176 = vmatmul.mubr.bf16.gmra.mxu0 %v1132
      %v1177 = vpop.f32.mrf.mxu0
      %v1178 = vadd.f32 %v1099, %v1177
      %v1179 = vpop.f32.mrf.mxu0
      %v1180 = vpop.f32.mrf.mxu0
      %v1181 = vadd.f32 %v1099, %v1180
      %v1182 = vpop.f32.mrf.mxu0
      %1183 = vmatprep.mubr.bf16.mxu0 0
      %1184 = vmatmul.mubr.bf16.gmra.mxu0 %v1135
      %v1185 = vpop.f32.mrf.mxu0
      %v1186 = vadd.f32 %v1099, %v1185
      %v1187 = vpop.f32.mrf.mxu0
      %v1188 = vpop.f32.mrf.mxu0
      %v1189 = vadd.f32 %v1099, %v1188
      %v1190 = vpop.f32.mrf.mxu0
      %1191 = vmatprep.mubr.bf16.mxu0 0
      %1192 = vmatmul.mubr.bf16.gmra.mxu0 %v1138
      %v1193 = vpop.f32.mrf.mxu0
      %v1194 = vadd.f32 %v1099, %v1193
      %v1195 = vpop.f32.mrf.mxu0
      %v1196 = vpop.f32.mrf.mxu0
      %v1197 = vadd.f32 %v1099, %v1196
      %v1198 = vpop.f32.mrf.mxu0
      %1199 = vmatprep.mubr.bf16.mxu0 0
      %1200 = vmatmul.mubr.bf16.gmra.mxu0 %v1141
      %v1201 = vpop.f32.mrf.mxu0
      %v1202 = vadd.f32 %v1099, %v1201
      %v1203 = vpop.f32.mrf.mxu0
      %v1204 = vpop.f32.mrf.mxu0
      %v1205 = vpop.f32.mrf.mxu0
      %1206 = vdwg.mxu0
      %1207 = vst [vmem:[#allocation2] sm:$0xff] %v1178
      %1208 = vst [vmem:[#allocation2 + $0x8] sm:$0xff] %v1181
      %1209 = vst [vmem:[#allocation2 + $0x10] sm:$0xff] %v1186
      %1210 = vst [vmem:[#allocation2 + $0x18] sm:$0xff] %v1189
      %1211 = vst [vmem:[#allocation2 + $0x20] sm:$0xff] %v1194
      %1212 = vst [vmem:[#allocation2 + $0x28] sm:$0xff] %v1197
      %1213 = vst [vmem:[#allocation2 + $0x30] sm:$0xff] %v1202
      %v1214 = vld [vmem:[#allocation2] sm:$0xff]
      %v1219 = vunpack.c.l.b16 %v1083
      %v1220 = vunpack.c.l.b16 %v1084
      %v1221 = vunpack.c.l.b16 %v1085
      %v1222 = vunpack.c.l.b16 %v1086
      %v1223 = vpack.c.b16 %v1220, %v1219
      %v1224 = vpack.c.b16 %v1222, %v1221
      %1227 = vmatprep.subr.bf16.mxu0 0
      %1228 = vmatpush1.bf16.msra.mxu0 0
      %1229 = vmatprep.subr.bf16.mxu0 0
      %1230 = vmatpush1.bf16.msra.mxu0 0
      %1231 = vmatprep.subr.bf16.mxu0 0
      %1232 = vmatpush1.bf16.msra.mxu0 0
      %1233 = vmatprep.subr.bf16.mxu0 0
      %1234 = vmatpush1.bf16.msra.mxu0 0
      %1235 = vmatprep.subr.bf16.mxu0 0
      %1236 = vmatpush1.bf16.msra.mxu0 0
      %1237 = vmatprep.subr.bf16.mxu0 0
      %1238 = vmatpush1.bf16.msra.mxu0 0
      %1239 = vmatprep.subr.bf16.mxu0 0
      %1240 = vmatpush1.bf16.msra.mxu0 %v1224
      %1241 = vmatprep.subr.bf16.mxu0 0
      %1242 = vmatpush1.bf16.msra.mxu0 %v1223
      %1243 = vmatprep.subr.bf16.mxu0 0
      %1244 = vmatpush2.bf16.msra.mxu0 0
      %1245 = vmatprep.subr.bf16.mxu0 0
      %1246 = vmatpush2.bf16.msra.mxu0 0
      %1247 = vmatprep.subr.bf16.mxu0 0
      %1248 = vmatpush2.bf16.msra.mxu0 0
      %1249 = vmatprep.subr.bf16.mxu0 0
      %1250 = vmatpush2.bf16.msra.mxu0 0
      %1251 = vmatprep.subr.bf16.mxu0 0
      %1252 = vmatpush2.bf16.msra.mxu0 0
      %1253 = vmatprep.subr.bf16.mxu0 0
      %1254 = vmatpush2.bf16.msra.mxu0 0
      %1255 = vmatprep.subr.bf16.mxu0 0
      %1256 = vmatpush2.bf16.msra.mxu0 0
      %1257 = vmatprep.subr.bf16.mxu0 0
      %1258 = vmatpush2.bf16.msra.mxu0 0
      %1259 = vmatprep.mubr.bf16.mxu0 0
      %1260 = vmatmul.mubr.bf16.gmra.mxu0 %v489
      %v1261 = vpop.f32.mrf.mxu0
      %v1262 = vadd.f32 0.0, %v1261
      %v1263 = vpop.f32.mrf.mxu0
      %v1264 = vpop.f32.mrf.mxu0
      %v1265 = vpop.f32.mrf.mxu0
      %1266 = vdwg.mxu0
      %v1267 = vadd.f32 %v1214, %v1262
      %v1268 = vmul.f32 %v1267, 2.0
      %v1269 = vsel %vm338, %v1268, %v1267
      %v1270 = vxor.u32 %v1269, 2147483648
      %v1271 = vmul.f32 %v1270, 1.442695
      %v1272 = vpow.pop %v1271
      %v1273 = vadd.f32 %v1272, 1.0
      %v1274 = vrcp.pop %v1273
      %v1275 = vmul.f32 1.0, %v1274
      %v1276 = vmul.f32 %v1275, 2.0
      %v1277 = vsub.f32 %v1276, 1.0
      %v1278 = vsel %vm338, %v1277, %v1275
      %v1279 = vmul.f32 %v1278, 0.0
      %1281 = vrot.lane.b32.xlu0 %v1278, 64
      %v1282 = vpop.permute.xlu0 %1281
      %v1284 = vmul.f32 %v1278, %v1282
      %1286 = vrot.lane.b32.xlu0 %v1284, 32
      %v1287 = vpop.permute.xlu0 %1286
      %v1289 = vadd.f32 %v1279, %v1287
      %v1290 = vtanh.pop %v1289
      %1292 = vrot.lane.b32.xlu0 %v1290, 64
      %v1293 = vpop.permute.xlu0 %1292
      %v1295 = vmul.f32 %v1278, %v1293
      %v1296 = vpack.c.bf16 %v1295, %v1295
      %v1298 = vunpack.c.l.b16 %v1296
      %v1299 = vpack.c.b16 %v1298, %v1298
      %1300 = vrot.lane.b32.xlu0 %v1299, 32
      %v1301 = vpop.permute.xlu0 %1300
      %1303 = vst.msk [vmem:[#allocation3] sm:$0xf] %vm567, %v1301
      %v1304 = vld [vmem:[%s569] sm:$0xff]
      %1305 = vrot.lane.b32.xlu0 %v1296, 32
      %v1306 = vpop.permute.xlu0 %1305
      %v1308 = vsel %vm391, %v1306, 0
      %1310 = vmatprep.subr.bf16.mxu0 0
      %1311 = vmatpush1.bf16.msra.mxu0 0
      %1312 = vmatprep.subr.bf16.mxu0 0
      %1313 = vmatpush1.bf16.msra.mxu0 0
      %1314 = vmatprep.subr.bf16.mxu0 0
      %1315 = vmatpush1.bf16.msra.mxu0 0
      %1316 = vmatprep.subr.bf16.mxu0 0
      %1317 = vmatpush1.bf16.msra.mxu0 0
      %1318 = vmatprep.subr.bf16.mxu0 0
      %1319 = vmatpush1.bf16.msra.mxu0 0
      %1320 = vmatprep.subr.bf16.mxu0 0
      %1321 = vmatpush1.bf16.msra.mxu0 0
      %1322 = vmatprep.subr.bf16.mxu0 0
      %1323 = vmatpush1.bf16.msra.mxu0 %v1224
      %1324 = vmatprep.subr.bf16.mxu0 0
      %1325 = vmatpush1.bf16.msra.mxu0 %v1223
      %1326 = vmatprep.subr.bf16.mxu0 0
      %1327 = vmatpush2.bf16.msra.mxu0 0
      %1328 = vmatprep.subr.bf16.mxu0 0
      %1329 = vmatpush2.bf16.msra.mxu0 0
      %1330 = vmatprep.subr.bf16.mxu0 0
      %1331 = vmatpush2.bf16.msra.mxu0 0
      %1332 = vmatprep.subr.bf16.mxu0 0
      %1333 = vmatpush2.bf16.msra.mxu0 0
      %1334 = vmatprep.subr.bf16.mxu0 0
      %1335 = vmatpush2.bf16.msra.mxu0 0
      %1336 = vmatprep.subr.bf16.mxu0 0
      %1337 = vmatpush2.bf16.msra.mxu0 0
      %1338 = vmatprep.subr.bf16.mxu0 0
      %1339 = vmatpush2.bf16.msra.mxu0 0
      %1340 = vmatprep.subr.bf16.mxu0 0
      %1341 = vmatpush2.bf16.msra.mxu0 0
      %1342 = vmatprep.mubr.bf16.mxu0 0
      %1343 = vmatmul.mubr.bf16.gmra.mxu0 %v1308
      %v1344 = vpop.f32.mrf.mxu0
      %v1345 = vadd.f32 0.0, %v1344
      %v1346 = vpop.f32.mrf.mxu0
      %v1347 = vpop.f32.mrf.mxu0
      %v1348 = vpop.f32.mrf.mxu0
      %1349 = vdwg.mxu0
      %v1350 = vadd.f32 %v1304, %v1345
      %v1351 = vmul.f32 %v1350, 2.0
      %v1352 = vsel %vm338, %v1351, %v1350
      %v1353 = vxor.u32 %v1352, 2147483648
      %v1354 = vmul.f32 %v1353, 1.442695
      %v1355 = vpow.pop %v1354
      %v1356 = vadd.f32 %v1355, 1.0
      %v1357 = vrcp.pop %v1356
      %v1358 = vmul.f32 1.0, %v1357
      %v1359 = vmul.f32 %v1358, 2.0
      %v1360 = vsub.f32 %v1359, 1.0
      %v1361 = vsel %vm338, %v1360, %v1358
      %v1362 = vmul.f32 %v1361, %v1289
      %1364 = vrot.lane.b32.xlu0 %v1361, 64
      %v1365 = vpop.permute.xlu0 %1364
      %v1367 = vmul.f32 %v1361, %v1365
      %1369 = vrot.lane.b32.xlu0 %v1367, 32
      %v1370 = vpop.permute.xlu0 %1369
      %v1372 = vadd.f32 %v1362, %v1370
      %v1373 = vtanh.pop %v1372
      %1375 = vrot.lane.b32.xlu0 %v1373, 64
      %v1376 = vpop.permute.xlu0 %1375
      %v1378 = vmul.f32 %v1361, %v1376
      %v1379 = vpack.c.bf16 %v1378, %v1378
      %v1381 = vunpack.c.l.b16 %v1379
      %v1382 = vpack.c.b16 %v1381, %v1381
      %1383 = vrot.lane.b32.xlu0 %v1382, 32
      %v1384 = vpop.permute.xlu0 %1383
      %1386 = vst.msk [vmem:[%s652] sm:$0xf] %vm567, %v1384
      %v1387 = vld [vmem:[%s654] sm:$0xff]
      %1388 = vrot.lane.b32.xlu0 %v1379, 32
      %v1389 = vpop.permute.xlu0 %1388
      %v1391 = vsel %vm391, %v1389, 0
      %1393 = vmatprep.subr.bf16.mxu0 0
      %1394 = vmatpush1.bf16.msra.mxu0 0
      %1395 = vmatprep.subr.bf16.mxu0 0
      %1396 = vmatpush1.bf16.msra.mxu0 0
      %1397 = vmatprep.subr.bf16.mxu0 0
      %1398 = vmatpush1.bf16.msra.mxu0 0
      %1399 = vmatprep.subr.bf16.mxu0 0
      %1400 = vmatpush1.bf16.msra.mxu0 0
      %1401 = vmatprep.subr.bf16.mxu0 0
      %1402 = vmatpush1.bf16.msra.mxu0 0
      %1403 = vmatprep.subr.bf16.mxu0 0
      %1404 = vmatpush1.bf16.msra.mxu0 0
      %1405 = vmatprep.subr.bf16.mxu0 0
      %1406 = vmatpush1.bf16.msra.mxu0 %v1224
      %1407 = vmatprep.subr.bf16.mxu0 0
      %1408 = vmatpush1.bf16.msra.mxu0 %v1223
      %1409 = vmatprep.subr.bf16.mxu0 0
      %1410 = vmatpush2.bf16.msra.mxu0 0
      %1411 = vmatprep.subr.bf16.mxu0 0
      %1412 = vmatpush2.bf16.msra.mxu0 0
      %1413 = vmatprep.subr.bf16.mxu0 0
      %1414 = vmatpush2.bf16.msra.mxu0 0
      %1415 = vmatprep.subr.bf16.mxu0 0
      %1416 = vmatpush2.bf16.msra.mxu0 0
      %1417 = vmatprep.subr.bf16.mxu0 0
      %1418 = vmatpush2.bf16.msra.mxu0 0
      %1419 = vmatprep.subr.bf16.mxu0 0
      %1420 = vmatpush2.bf16.msra.mxu0 0
      %1421 = vmatprep.subr.bf16.mxu0 0
      %1422 = vmatpush2.bf16.msra.mxu0 0
      %1423 = vmatprep.subr.bf16.mxu0 0
      %1424 = vmatpush2.bf16.msra.mxu0 0
      %1425 = vmatprep.mubr.bf16.mxu0 0
      %1426 = vmatmul.mubr.bf16.gmra.mxu0 %v1391
      %v1427 = vpop.f32.mrf.mxu0
      %v1428 = vadd.f32 0.0, %v1427
      %v1429 = vpop.f32.mrf.mxu0
      %v1430 = vpop.f32.mrf.mxu0
      %v1431 = vpop.f32.mrf.mxu0
      %1432 = vdwg.mxu0
      %v1433 = vadd.f32 %v1387, %v1428
      %v1434 = vmul.f32 %v1433, 2.0
      %v1435 = vsel %vm338, %v1434, %v1433
      %v1436 = vxor.u32 %v1435, 2147483648
      %v1437 = vmul.f32 %v1436, 1.442695
      %v1438 = vpow.pop %v1437
      %v1439 = vadd.f32 %v1438, 1.0
      %v1440 = vrcp.pop %v1439
      %v1441 = vmul.f32 1.0, %v1440
      %v1442 = vmul.f32 %v1441, 2.0
      %v1443 = vsub.f32 %v1442, 1.0
      %v1444 = vsel %vm338, %v1443, %v1441
      %v1445 = vmul.f32 %v1444, %v1372
      %1447 = vrot.lane.b32.xlu0 %v1444, 64
      %v1448 = vpop.permute.xlu0 %1447
      %v1450 = vmul.f32 %v1444, %v1448
      %1452 = vrot.lane.b32.xlu0 %v1450, 32
      %v1453 = vpop.permute.xlu0 %1452
      %v1455 = vadd.f32 %v1445, %v1453
      %v1456 = vtanh.pop %v1455
      %1458 = vrot.lane.b32.xlu0 %v1456, 64
      %v1459 = vpop.permute.xlu0 %1458
      %v1461 = vmul.f32 %v1444, %v1459
      %v1462 = vpack.c.bf16 %v1461, %v1461
      %v1464 = vunpack.c.l.b16 %v1462
      %v1465 = vpack.c.b16 %v1464, %v1464
      %1466 = vrot.lane.b32.xlu0 %v1465, 32
      %v1467 = vpop.permute.xlu0 %1466
      %1469 = vst.msk [vmem:[%s737] sm:$0xf] %vm567, %v1467
      %v1470 = vld [vmem:[%s739] sm:$0xff]
      %1471 = vrot.lane.b32.xlu0 %v1462, 32
      %v1472 = vpop.permute.xlu0 %1471
      %v1474 = vsel %vm391, %v1472, 0
      %1476 = vmatprep.subr.bf16.mxu0 0
      %1477 = vmatpush1.bf16.msra.mxu0 0
      %1478 = vmatprep.subr.bf16.mxu0 0
      %1479 = vmatpush1.bf16.msra.mxu0 0
      %1480 = vmatprep.subr.bf16.mxu0 0
      %1481 = vmatpush1.bf16.msra.mxu0 0
      %1482 = vmatprep.subr.bf16.mxu0 0
      %1483 = vmatpush1.bf16.msra.mxu0 0
      %1484 = vmatprep.subr.bf16.mxu0 0
      %1485 = vmatpush1.bf16.msra.mxu0 0
      %1486 = vmatprep.subr.bf16.mxu0 0
      %1487 = vmatpush1.bf16.msra.mxu0 0
      %1488 = vmatprep.subr.bf16.mxu0 0
      %1489 = vmatpush1.bf16.msra.mxu0 %v1224
      %1490 = vmatprep.subr.bf16.mxu0 0
      %1491 = vmatpush1.bf16.msra.mxu0 %v1223
      %1492 = vmatprep.subr.bf16.mxu0 0
      %1493 = vmatpush2.bf16.msra.mxu0 0
      %1494 = vmatprep.subr.bf16.mxu0 0
      %1495 = vmatpush2.bf16.msra.mxu0 0
      %1496 = vmatprep.subr.bf16.mxu0 0
      %1497 = vmatpush2.bf16.msra.mxu0 0
      %1498 = vmatprep.subr.bf16.mxu0 0
      %1499 = vmatpush2.bf16.msra.mxu0 0
      %1500 = vmatprep.subr.bf16.mxu0 0
      %1501 = vmatpush2.bf16.msra.mxu0 0
      %1502 = vmatprep.subr.bf16.mxu0 0
      %1503 = vmatpush2.bf16.msra.mxu0 0
      %1504 = vmatprep.subr.bf16.mxu0 0
      %1505 = vmatpush2.bf16.msra.mxu0 0
      %1506 = vmatprep.subr.bf16.mxu0 0
      %1507 = vmatpush2.bf16.msra.mxu0 0
      %1508 = vmatprep.mubr.bf16.mxu0 0
      %1509 = vmatmul.mubr.bf16.gmra.mxu0 %v1474
      %v1510 = vpop.f32.mrf.mxu0
      %v1511 = vadd.f32 0.0, %v1510
      %v1512 = vpop.f32.mrf.mxu0
      %v1513 = vpop.f32.mrf.mxu0
      %v1514 = vpop.f32.mrf.mxu0
      %1515 = vdwg.mxu0
      %v1516 = vadd.f32 %v1470, %v1511
      %v1517 = vmul.f32 %v1516, 2.0
      %v1518 = vsel %vm338, %v1517, %v1516
      %v1519 = vxor.u32 %v1518, 2147483648
      %v1520 = vmul.f32 %v1519, 1.442695
      %v1521 = vpow.pop %v1520
      %v1522 = vadd.f32 %v1521, 1.0
      %v1523 = vrcp.pop %v1522
      %v1524 = vmul.f32 1.0, %v1523
      %v1525 = vmul.f32 %v1524, 2.0
      %v1526 = vsub.f32 %v1525, 1.0
      %v1527 = vsel %vm338, %v1526, %v1524
      %v1528 = vmul.f32 %v1527, %v1455
      %1530 = vrot.lane.b32.xlu0 %v1527, 64
      %v1531 = vpop.permute.xlu0 %1530
      %v1533 = vmul.f32 %v1527, %v1531
      %1535 = vrot.lane.b32.xlu0 %v1533, 32
      %v1536 = vpop.permute.xlu0 %1535
      %v1538 = vadd.f32 %v1528, %v1536
      %v1539 = vtanh.pop %v1538
      %1541 = vrot.lane.b32.xlu0 %v1539, 64
      %v1542 = vpop.permute.xlu0 %1541
      %v1544 = vmul.f32 %v1527, %v1542
      %v1545 = vpack.c.bf16 %v1544, %v1544
      %v1547 = vunpack.c.l.b16 %v1545
      %v1548 = vpack.c.b16 %v1547, %v1547
      %1549 = vrot.lane.b32.xlu0 %v1548, 32
      %v1550 = vpop.permute.xlu0 %1549
      %1552 = vst.msk [vmem:[%s822] sm:$0xf] %vm567, %v1550
      %v1553 = vld [vmem:[%s824] sm:$0xff]
      %1554 = vrot.lane.b32.xlu0 %v1545, 32
      %v1555 = vpop.permute.xlu0 %1554
      %v1557 = vsel %vm391, %v1555, 0
      %1559 = vmatprep.subr.bf16.mxu0 0
      %1560 = vmatpush1.bf16.msra.mxu0 0
      %1561 = vmatprep.subr.bf16.mxu0 0
      %1562 = vmatpush1.bf16.msra.mxu0 0
      %1563 = vmatprep.subr.bf16.mxu0 0
      %1564 = vmatpush1.bf16.msra.mxu0 0
      %1565 = vmatprep.subr.bf16.mxu0 0
      %1566 = vmatpush1.bf16.msra.mxu0 0
      %1567 = vmatprep.subr.bf16.mxu0 0
      %1568 = vmatpush1.bf16.msra.mxu0 0
      %1569 = vmatprep.subr.bf16.mxu0 0
      %1570 = vmatpush1.bf16.msra.mxu0 0
      %1571 = vmatprep.subr.bf16.mxu0 0
      %1572 = vmatpush1.bf16.msra.mxu0 %v1224
      %1573 = vmatprep.subr.bf16.mxu0 0
      %1574 = vmatpush1.bf16.msra.mxu0 %v1223
      %1575 = vmatprep.subr.bf16.mxu0 0
      %1576 = vmatpush2.bf16.msra.mxu0 0
      %1577 = vmatprep.subr.bf16.mxu0 0
      %1578 = vmatpush2.bf16.msra.mxu0 0
      %1579 = vmatprep.subr.bf16.mxu0 0
      %1580 = vmatpush2.bf16.msra.mxu0 0
      %1581 = vmatprep.subr.bf16.mxu0 0
      %1582 = vmatpush2.bf16.msra.mxu0 0
      %1583 = vmatprep.subr.bf16.mxu0 0
      %1584 = vmatpush2.bf16.msra.mxu0 0
      %1585 = vmatprep.subr.bf16.mxu0 0
      %1586 = vmatpush2.bf16.msra.mxu0 0
      %1587 = vmatprep.subr.bf16.mxu0 0
      %1588 = vmatpush2.bf16.msra.mxu0 0
      %1589 = vmatprep.subr.bf16.mxu0 0
      %1590 = vmatpush2.bf16.msra.mxu0 0
      %1591 = vmatprep.mubr.bf16.mxu0 0
      %1592 = vmatmul.mubr.bf16.gmra.mxu0 %v1557
      %v1593 = vpop.f32.mrf.mxu0
      %v1594 = vadd.f32 0.0, %v1593
      %v1595 = vpop.f32.mrf.mxu0
      %v1596 = vpop.f32.mrf.mxu0
      %v1597 = vpop.f32.mrf.mxu0
      %1598 = vdwg.mxu0
      %v1599 = vadd.f32 %v1553, %v1594
      %v1600 = vmul.f32 %v1599, 2.0
      %v1601 = vsel %vm338, %v1600, %v1599
      %v1602 = vxor.u32 %v1601, 2147483648
      %v1603 = vmul.f32 %v1602, 1.442695
      %v1604 = vpow.pop %v1603
      %v1605 = vadd.f32 %v1604, 1.0
      %v1606 = vrcp.pop %v1605
      %v1607 = vmul.f32 1.0, %v1606
      %v1608 = vmul.f32 %v1607, 2.0
      %v1609 = vsub.f32 %v1608, 1.0
      %v1610 = vsel %vm338, %v1609, %v1607
      %v1611 = vmul.f32 %v1610, %v1538
      %1613 = vrot.lane.b32.xlu0 %v1610, 64
      %v1614 = vpop.permute.xlu0 %1613
      %v1616 = vmul.f32 %v1610, %v1614
      %1618 = vrot.lane.b32.xlu0 %v1616, 32
      %v1619 = vpop.permute.xlu0 %1618
      %v1621 = vadd.f32 %v1611, %v1619
      %v1622 = vtanh.pop %v1621
      %1624 = vrot.lane.b32.xlu0 %v1622, 64
      %v1625 = vpop.permute.xlu0 %1624
      %v1627 = vmul.f32 %v1610, %v1625
      %v1628 = vpack.c.bf16 %v1627, %v1627
      %v1630 = vunpack.c.l.b16 %v1628
      %v1631 = vpack.c.b16 %v1630, %v1630
      %1632 = vrot.lane.b32.xlu0 %v1631, 32
      %v1633 = vpop.permute.xlu0 %1632
      %1635 = vst.msk [vmem:[%s907] sm:$0xf] %vm567, %v1633
      %v1636 = vld [vmem:[%s909] sm:$0xff]
      %1637 = vrot.lane.b32.xlu0 %v1628, 32
      %v1638 = vpop.permute.xlu0 %1637
      %v1640 = vsel %vm391, %v1638, 0
      %1642 = vmatprep.subr.bf16.mxu0 0
      %1643 = vmatpush1.bf16.msra.mxu0 0
      %1644 = vmatprep.subr.bf16.mxu0 0
      %1645 = vmatpush1.bf16.msra.mxu0 0
      %1646 = vmatprep.subr.bf16.mxu0 0
      %1647 = vmatpush1.bf16.msra.mxu0 0
      %1648 = vmatprep.subr.bf16.mxu0 0
      %1649 = vmatpush1.bf16.msra.mxu0 0
      %1650 = vmatprep.subr.bf16.mxu0 0
      %1651 = vmatpush1.bf16.msra.mxu0 0
      %1652 = vmatprep.subr.bf16.mxu0 0
      %1653 = vmatpush1.bf16.msra.mxu0 0
      %1654 = vmatprep.subr.bf16.mxu0 0
      %1655 = vmatpush1.bf16.msra.mxu0 %v1224
      %1656 = vmatprep.subr.bf16.mxu0 0
      %1657 = vmatpush1.bf16.msra.mxu0 %v1223
      %1658 = vmatprep.subr.bf16.mxu0 0
      %1659 = vmatpush2.bf16.msra.mxu0 0
      %1660 = vmatprep.subr.bf16.mxu0 0
      %1661 = vmatpush2.bf16.msra.mxu0 0
      %1662 = vmatprep.subr.bf16.mxu0 0
      %1663 = vmatpush2.bf16.msra.mxu0 0
      %1664 = vmatprep.subr.bf16.mxu0 0
      %1665 = vmatpush2.bf16.msra.mxu0 0
      %1666 = vmatprep.subr.bf16.mxu0 0
      %1667 = vmatpush2.bf16.msra.mxu0 0
      %1668 = vmatprep.subr.bf16.mxu0 0
      %1669 = vmatpush2.bf16.msra.mxu0 0
      %1670 = vmatprep.subr.bf16.mxu0 0
      %1671 = vmatpush2.bf16.msra.mxu0 0
      %1672 = vmatprep.subr.bf16.mxu0 0
      %1673 = vmatpush2.bf16.msra.mxu0 0
      %1674 = vmatprep.mubr.bf16.mxu0 0
      %1675 = vmatmul.mubr.bf16.gmra.mxu0 %v1640
      %v1676 = vpop.f32.mrf.mxu0
      %v1677 = vadd.f32 0.0, %v1676
      %v1678 = vpop.f32.mrf.mxu0
      %v1679 = vpop.f32.mrf.mxu0
      %v1680 = vpop.f32.mrf.mxu0
      %1681 = vdwg.mxu0
      %v1682 = vadd.f32 %v1636, %v1677
      %v1683 = vmul.f32 %v1682, 2.0
      %v1684 = vsel %vm338, %v1683, %v1682
      %v1685 = vxor.u32 %v1684, 2147483648
      %v1686 = vmul.f32 %v1685, 1.442695
      %v1687 = vpow.pop %v1686
      %v1688 = vadd.f32 %v1687, 1.0
      %v1689 = vrcp.pop %v1688
      %v1690 = vmul.f32 1.0, %v1689
      %v1691 = vmul.f32 %v1690, 2.0
      %v1692 = vsub.f32 %v1691, 1.0
      %v1693 = vsel %vm338, %v1692, %v1690
      %v1694 = vmul.f32 %v1693, %v1621
      %1696 = vrot.lane.b32.xlu0 %v1693, 64
      %v1697 = vpop.permute.xlu0 %1696
      %v1699 = vmul.f32 %v1693, %v1697
      %1701 = vrot.lane.b32.xlu0 %v1699, 32
      %v1702 = vpop.permute.xlu0 %1701
      %v1704 = vadd.f32 %v1694, %v1702
      %v1705 = vtanh.pop %v1704
      %1707 = vrot.lane.b32.xlu0 %v1705, 64
      %v1708 = vpop.permute.xlu0 %1707
      %v1710 = vmul.f32 %v1693, %v1708
      %v1711 = vpack.c.bf16 %v1710, %v1710
      %v1713 = vunpack.c.l.b16 %v1711
      %v1714 = vpack.c.b16 %v1713, %v1713
      %1715 = vrot.lane.b32.xlu0 %v1714, 32
      %v1716 = vpop.permute.xlu0 %1715
      %1718 = vst.msk [vmem:[%s992] sm:$0xf] %vm567, %v1716
      %v1719 = vld [vmem:[%s994] sm:$0xff]
      %1720 = vrot.lane.b32.xlu0 %v1711, 32
      %v1721 = vpop.permute.xlu0 %1720
      %v1723 = vsel %vm391, %v1721, 0
      %1725 = vmatprep.subr.bf16.mxu0 0
      %1726 = vmatpush1.bf16.msra.mxu0 0
      %1727 = vmatprep.subr.bf16.mxu0 0
      %1728 = vmatpush1.bf16.msra.mxu0 0
      %1729 = vmatprep.subr.bf16.mxu0 0
      %1730 = vmatpush1.bf16.msra.mxu0 0
      %1731 = vmatprep.subr.bf16.mxu0 0
      %1732 = vmatpush1.bf16.msra.mxu0 0
      %1733 = vmatprep.subr.bf16.mxu0 0
      %1734 = vmatpush1.bf16.msra.mxu0 0
      %1735 = vmatprep.subr.bf16.mxu0 0
      %1736 = vmatpush1.bf16.msra.mxu0 0
      %1737 = vmatprep.subr.bf16.mxu0 0
      %1738 = vmatpush1.bf16.msra.mxu0 %v1224
      %1739 = vmatprep.subr.bf16.mxu0 0
      %1740 = vmatpush1.bf16.msra.mxu0 %v1223
      %1741 = vmatprep.subr.bf16.mxu0 0
      %1742 = vmatpush2.bf16.msra.mxu0 0
      %1743 = vmatprep.subr.bf16.mxu0 0
      %1744 = vmatpush2.bf16.msra.mxu0 0
      %1745 = vmatprep.subr.bf16.mxu0 0
      %1746 = vmatpush2.bf16.msra.mxu0 0
      %1747 = vmatprep.subr.bf16.mxu0 0
      %1748 = vmatpush2.bf16.msra.mxu0 0
      %1749 = vmatprep.subr.bf16.mxu0 0
      %1750 = vmatpush2.bf16.msra.mxu0 0
      %1751 = vmatprep.subr.bf16.mxu0 0
      %1752 = vmatpush2.bf16.msra.mxu0 0
      %1753 = vmatprep.subr.bf16.mxu0 0
      %1754 = vmatpush2.bf16.msra.mxu0 0
      %1755 = vmatprep.subr.bf16.mxu0 0
      %1756 = vmatpush2.bf16.msra.mxu0 0
      %1757 = vmatprep.mubr.bf16.mxu0 0
      %1758 = vmatmul.mubr.bf16.gmra.mxu0 %v1723
      %v1759 = vpop.f32.mrf.mxu0
      %v1760 = vadd.f32 0.0, %v1759
      %v1761 = vpop.f32.mrf.mxu0
      %v1762 = vpop.f32.mrf.mxu0
      %v1763 = vpop.f32.mrf.mxu0
      %1764 = vdwg.mxu0
      %v1765 = vadd.f32 %v1719, %v1760
      %v1766 = vmul.f32 %v1765, 2.0
      %v1767 = vsel %vm338, %v1766, %v1765
      %v1768 = vxor.u32 %v1767, 2147483648
      %v1769 = vmul.f32 %v1768, 1.442695
      %v1770 = vpow.pop %v1769
      %v1771 = vadd.f32 %v1770, 1.0
      %v1772 = vrcp.pop %v1771
      %v1773 = vmul.f32 1.0, %v1772
      %v1774 = vmul.f32 %v1773, 2.0
      %v1775 = vsub.f32 %v1774, 1.0
      %v1776 = vsel %vm338, %v1775, %v1773
      %v1777 = vmul.f32 %v1776, %v1704
      %1779 = vrot.lane.b32.xlu0 %v1776, 64
      %v1780 = vpop.permute.xlu0 %1779
      %v1782 = vmul.f32 %v1776, %v1780
      %1784 = vrot.lane.b32.xlu0 %v1782, 32
      %v1785 = vpop.permute.xlu0 %1784
      %v1787 = vadd.f32 %v1777, %v1785
      %v1788 = vtanh.pop %v1787
      %1790 = vrot.lane.b32.xlu0 %v1788, 64
      %v1791 = vpop.permute.xlu0 %1790
      %v1793 = vmul.f32 %v1776, %v1791
      %v1794 = vpack.c.bf16 %v1793, %v1793
      %v1796 = vunpack.c.l.b16 %v1794
      %v1797 = vpack.c.b16 %v1796, %v1796
      %1798 = vrot.lane.b32.xlu0 %v1797, 32
      %v1799 = vpop.permute.xlu0 %1798
      %1801 = vst.msk [vmem:[%s1077] sm:$0xf] %vm567, %v1799
      %v1802 = vld [vmem:[#allocation3] sm:$0xf]
      %v1803 = vld [vmem:[#allocation3 + $0x4] sm:$0xf]
      %v1804 = vld [vmem:[#allocation3 + $0x8] sm:$0xf]
      %v1805 = vld [vmem:[#allocation3 + $0xc] sm:$0xf]
      %v1806 = vld [vmem:[#allocation3 + $0x10] sm:$0xf]
      %v1807 = vld [vmem:[#allocation3 + $0x14] sm:$0xf]
      %v1808 = vld [vmem:[#allocation3 + $0x18] sm:$0xf]
      %v1809 = vld [vmem:[%s7] sm:$0xf]
      %v1810 = vld [vmem:[%s7 + $0x4] sm:$0xf]
      %v1811 = vld [vmem:[%s7 + $0x8] sm:$0xf]
      %v1812 = vld [vmem:[%s7 + $0xc] sm:$0xf]
      %v1813 = vld [vmem:[%s8] sm:$0x1]
      %v1815 = vlaneseq
      %v1816 = vshrl.u32 %v1815, 7
      %v1817 = vsub.s32 0, %v1816
      %v1818 = vrot.slane %v1813, %v1817
      %v1827 = vunpack.c.l.b16 %v1802
      %v1828 = vunpack.c.l.b16 %v1803
      %v1829 = vunpack.c.l.b16 %v1804
      %v1830 = vunpack.c.l.b16 %v1805
      %v1831 = vunpack.c.l.b16 %v1806
      %v1832 = vunpack.c.l.b16 %v1807
      %v1833 = vunpack.c.l.b16 %v1808
      %v1834 = vpack.c.b16 %v1828, %v1827
      %v1835 = vpack.c.b16 %v1830, %v1829
      %v1836 = vpack.c.b16 %v1832, %v1831
      %v1837 = vpack.c.b16 %v1833, %v1833
      %v1842 = vunpack.c.l.b16 %v1809
      %v1843 = vunpack.c.l.b16 %v1810
      %v1844 = vunpack.c.l.b16 %v1811
      %v1845 = vunpack.c.l.b16 %v1812
      %v1846 = vpack.c.b16 %v1843, %v1842
      %v1847 = vpack.c.b16 %v1845, %v1844
      %v1851 = vsel %vm391, %v1834, 0
      %v1854 = vsel %vm391, %v1835, 0
      %v1857 = vsel %vm391, %v1836, 0
      %v1860 = vsel %vm391, %v1837, 0
      %1862 = vmatprep.subr.bf16.mxu0 0
      %1863 = vmatpush1.bf16.msra.mxu0 0
      %1864 = vmatprep.subr.bf16.mxu0 0
      %1865 = vmatpush1.bf16.msra.mxu0 0
      %1866 = vmatprep.subr.bf16.mxu0 0
      %1867 = vmatpush1.bf16.msra.mxu0 0
      %1868 = vmatprep.subr.bf16.mxu0 0
      %1869 = vmatpush1.bf16.msra.mxu0 0
      %1870 = vmatprep.subr.bf16.mxu0 0
      %1871 = vmatpush1.bf16.msra.mxu0 0
      %1872 = vmatprep.subr.bf16.mxu0 0
      %1873 = vmatpush1.bf16.msra.mxu0 0
      %1874 = vmatprep.subr.bf16.mxu0 0
      %1875 = vmatpush1.bf16.msra.mxu0 %v1847
      %1876 = vmatprep.subr.bf16.mxu0 0
      %1877 = vmatpush1.bf16.msra.mxu0 %v1846
      %1878 = vmatprep.subr.bf16.mxu0 0
      %1879 = vmatpush2.bf16.msra.mxu0 0
      %1880 = vmatprep.subr.bf16.mxu0 0
      %1881 = vmatpush2.bf16.msra.mxu0 0
      %1882 = vmatprep.subr.bf16.mxu0 0
      %1883 = vmatpush2.bf16.msra.mxu0 0
      %1884 = vmatprep.subr.bf16.mxu0 0
      %1885 = vmatpush2.bf16.msra.mxu0 0
      %1886 = vmatprep.subr.bf16.mxu0 0
      %1887 = vmatpush2.bf16.msra.mxu0 0
      %1888 = vmatprep.subr.bf16.mxu0 0
      %1889 = vmatpush2.bf16.msra.mxu0 0
      %1890 = vmatprep.subr.bf16.mxu0 0
      %1891 = vmatpush2.bf16.msra.mxu0 0
      %1892 = vmatprep.subr.bf16.mxu0 0
      %1893 = vmatpush2.bf16.msra.mxu0 0
      %1894 = vmatprep.mubr.bf16.mxu0 0
      %1895 = vmatmul.mubr.bf16.gmra.mxu0 %v1851
      %v1896 = vpop.f32.mrf.mxu0
      %v1897 = vadd.f32 %v1818, %v1896
      %v1898 = vpop.f32.mrf.mxu0
      %v1899 = vpop.f32.mrf.mxu0
      %v1900 = vadd.f32 %v1818, %v1899
      %v1901 = vpop.f32.mrf.mxu0
      %1902 = vmatprep.mubr.bf16.mxu0 0
      %1903 = vmatmul.mubr.bf16.gmra.mxu0 %v1854
      %v1904 = vpop.f32.mrf.mxu0
      %v1905 = vadd.f32 %v1818, %v1904
      %v1906 = vpop.f32.mrf.mxu0
      %v1907 = vpop.f32.mrf.mxu0
      %v1908 = vadd.f32 %v1818, %v1907
      %v1909 = vpop.f32.mrf.mxu0
      %1910 = vmatprep.mubr.bf16.mxu0 0
      %1911 = vmatmul.mubr.bf16.gmra.mxu0 %v1857
      %v1912 = vpop.f32.mrf.mxu0
      %v1913 = vadd.f32 %v1818, %v1912
      %v1914 = vpop.f32.mrf.mxu0
      %v1915 = vpop.f32.mrf.mxu0
      %v1916 = vadd.f32 %v1818, %v1915
      %v1917 = vpop.f32.mrf.mxu0
      %1918 = vmatprep.mubr.bf16.mxu0 0
      %1919 = vmatmul.mubr.bf16.gmra.mxu0 %v1860
      %v1920 = vpop.f32.mrf.mxu0
      %v1921 = vadd.f32 %v1818, %v1920
      %v1922 = vpop.f32.mrf.mxu0
      %v1923 = vpop.f32.mrf.mxu0
      %v1924 = vpop.f32.mrf.mxu0
      %1925 = vdwg.mxu0
      %1926 = vst [vmem:[%s332] sm:$0xff] %v1897
      %1927 = vst [vmem:[%s332 + $0x8] sm:$0xff] %v1900
      %1928 = vst [vmem:[%s332 + $0x10] sm:$0xff] %v1905
      %1929 = vst [vmem:[%s332 + $0x18] sm:$0xff] %v1908
      %1930 = vst [vmem:[%s332 + $0x20] sm:$0xff] %v1913
      %1931 = vst [vmem:[%s332 + $0x28] sm:$0xff] %v1916
      %1932 = vst [vmem:[%s332 + $0x30] sm:$0xff] %v1921
      %p1933 = scmp.lt.s32.totalorder %s20, 1
      %s1934 = scalar_select %p1933, %s20, 1
      %s1935 = smul.addr %s1934, 7
      %s1936 = smul.addr %s1935, 8
      %s1937 = scalar_lea.vmem %s9, %s1936
      // Predicated region
      $region57: #{decoder_rnn_forward.1} parent=55 // pred_check
        %p1938 = pneg %p232
      $region58: #{decoder_rnn_forward.1} parent=55 // pred_check_branch
        %1940 = sbr.rel (%p1938) target = $region60
      $region59: #{decoder_rnn_forward.1} parent=55 // pred_region
        _
      $region60: #{decoder_rnn_forward.1} parent=55 // pred_fallthru
        _
    $region56: #{decoder_rnn_forward.1} parent=5 // pred_fallthru
      _
    %p1941 = scmp.le.s32.totalorder 2, %s15
    // Predicated region
    $region61: #{decoder_rnn_forward.1} parent=5 // pred_check
      %p1942 = pneg %p1941
    $region62: #{decoder_rnn_forward.1} parent=5 // pred_check_branch
      %1944 = sbr.rel (%p1942) target = $region64
    $region63: #{decoder_rnn_forward.1} parent=5 // pred_region
      %s1945 = ssub.s32 %s15, 2
      // Predicated region
      $region65: #{decoder_rnn_forward.1} parent=63 // pred_check
        %p1946 = pneg %p238
      $region66: #{decoder_rnn_forward.1} parent=63 // pred_check_branch
        %1948 = sbr.rel (%p1946) target = $region68
      $region67: #{decoder_rnn_forward.1} parent=63 // pred_region
        %p1949 = scmp.lt.s32.totalorder %s21, 1
        %s1950 = scalar_select %p1949, %s21, 1
        %s1951 = smul.addr %s1950, 7
        %s1952 = smul.addr %s1951, 8
        %s1953 = scalar_lea.vmem %s9, %s1952
      $region68: #{decoder_rnn_forward.1} parent=63 // pred_fallthru
        _
    $region64: #{decoder_rnn_forward.1} parent=5 // pred_fallthru
      _
  $region6: #{decoder_rnn_forward.1} parent=0 // loop_footer
    %s19 = sadd.s32 1, %s15
  $region7: #{decoder_rnn_forward.1} parent=0 // loop_footer_branch
    %14 = sbr.rel target = $region3
  $region8: #{decoder_rnn_forward.1} parent=0 // loop_exit
    _

</llo_original>
